<compile_context>
chip_gen: v7x
topology: tpu7x:2x2x1
jax: 0.10.0
libtpu: 0.0.40
codegen_flags: <defaults>
</compile_context>

<pallas_src>
import numpy as np
import jax
import jax.numpy as jnp
from jax import lax
from jax.experimental import pallas as pl
from jax.experimental.pallas import tpu as pltpu

OUT_HW = 224


# ------------------------------ Pallas kernel --------------------------------

def _stft_resize_norm_kernel(ft_ref, cr_ref, ci_ref, awt_ref, out_ref):
    # ft_ref : (1, N, Tz)   transposed windowed-signal frames for one batch
    # cr/ci  : (224, N)     A_h(flipped) @ (hann * DFT)^T   (real / imag)
    # awt    : (Tz, 224)    time-axis bilinear resize matrix, transposed
    # out    : (1, 3, 224, 224)
    ft = ft_ref[0]                                                    # (N, Tz)

    # Shared time-resize intermediate, then the two folded "DFT+height-resize"
    # matmuls; all outputs are 224 lanes wide.
    t_mid = jnp.dot(ft, awt_ref[...], preferred_element_type=jnp.float32)   # (N, 224)
    sr = jnp.dot(cr_ref[...], t_mid, preferred_element_type=jnp.float32)    # (224, 224)
    si = jnp.dot(ci_ref[...], t_mid, preferred_element_type=jnp.float32)    # (224, 224)
    sm = jnp.sqrt(sr * sr + si * si)

    n_el = float(OUT_HW * OUT_HW)

    def zscore(a):
        # single pass: mean + unbiased variance from raw moments, rsqrt on EUP
        s = jnp.sum(a)
        ss = jnp.sum(a * a)
        mean = s / n_el
        var = (ss - s * mean) / (n_el - 1.0)   # unbiased, matches torch.std default
        return (a - mean) * lax.rsqrt(var)

    out_ref[0, 0, :, :] = zscore(sr)
    out_ref[0, 1, :, :] = zscore(si)
    out_ref[0, 2, :, :] = zscore(sm)


# ------------------------------- glue helpers --------------------------------

def _bilinear_matrix(out_size, in_size):
    """Row-interpolation matrix matching F.interpolate(mode='bilinear',
    align_corners=False) along one axis."""
    A = np.zeros((out_size, in_size), np.float64)
    scale = in_size / out_size
    for i in range(out_size):
        src = (i + 0.5) * scale - 0.5
        if src < 0.0:
            src = 0.0
        i0 = int(np.floor(src))
        if i0 > in_size - 1:
            i0 = in_size - 1
        i1 = min(i0 + 1, in_size - 1)
        lam = src - i0
        A[i, i0] += 1.0 - lam
        A[i, i1] += lam
    return A


class STFT:
    def __init__(self, window_size, hop_size, ppm_lim, t_lim):
        self.window_size = int(window_size)
        self.hop_size = int(hop_size)
        self.ppm_lim = eval(ppm_lim) if isinstance(ppm_lim, str) else tuple(ppm_lim)
        self.t_lim = eval(t_lim) if isinstance(t_lim, str) else tuple(t_lim)

    def __call__(self, x, fs, larmorfreq):
        # fs / larmorfreq must be static Python scalars: the ppm / t masks
        # determine downstream array *shapes*.
        fs = float(fs)
        larmorfreq = float(larmorfreq)
        N = self.window_size
        hop = self.hop_size
        B, L = x.shape

        # ---- static setup: hann window, fftshift order, ppm / t masks ----
        n = np.arange(N, dtype=np.float64)
        window = 0.5 * (1.0 - np.cos(2.0 * np.pi * n / N))   # torch.hann_window (periodic)

        f = np.fft.fftfreq(N, d=1.0 / fs)
        order = np.concatenate([np.arange(N // 2, N), np.arange(0, N // 2)])
        f_ordered = f[order]
        ppm_axis = 4.65 - f_ordered / larmorfreq
        ppm_mask = (ppm_axis >= self.ppm_lim[0]) & (ppm_axis <= self.ppm_lim[1])
        freq_bins = order[ppm_mask]                           # kept FFT bins, shifted order
        Fz = int(freq_bins.shape[0])

        num_frames = 1 + L // hop                             # torch.stft, center=True
        t = np.linspace(0.0, (num_frames - 1) * (hop / fs), num_frames)
        t_mask = (t >= self.t_lim[0]) & (t <= self.t_lim[1])
        frame_idx = np.nonzero(t_mask)[0].astype(np.int32)
        Tz = int(frame_idx.shape[0])
        assert Fz > 0 and Tz > 0, "ppm/t limits masked out everything"

        # Windowed DFT weights restricted to the kept (shifted, masked) bins.
        k = freq_bins[None, :].astype(np.float64)
        ang = 2.0 * np.pi * n[:, None] * k / N
        wr = window[:, None] * np.cos(ang)                    # (N, Fz)
        wi = -window[:, None] * np.sin(ang)                   # (N, Fz)

        # Bilinear resize matrices; torch.flip(dims=[2]) baked into A_h rows;
        # A_h folded into the DFT weights on the host (removes Fz entirely).
        ah_flip = _bilinear_matrix(OUT_HW, Fz)[::-1]          # (224, Fz)
        cr = np.ascontiguousarray(ah_flip @ wr.T).astype(np.float32)   # (224, N)
        ci = np.ascontiguousarray(ah_flip @ wi.T).astype(np.float32)   # (224, N)
        awt = np.ascontiguousarray(_bilinear_matrix(OUT_HW, Tz).T).astype(np.float32)  # (Tz, 224)

        # ---- framing (glue): reflect pad (torch.stft center=True) + gather ----
        # Frames are gathered transposed, (B, N, Tz), so every in-kernel dot is
        # a standard row-major contraction.
        # TODO(synk): for large L, build frames in-kernel from the padded signal
        # with overlapping pl.ds windows instead of materializing this gather.
        pad = N // 2
        xp = jnp.pad(x.astype(jnp.float32), ((0, 0), (pad, pad)), mode="reflect")
        gather_t = frame_idx[None, :] * hop + np.arange(N, dtype=np.int32)[:, None]  # (N, Tz)
        frames_t = xp[:, gather_t]                                     # (B, N, Tz)

        # ---- single fused kernel: STFT + resize + magnitude + z-score ----
        out = pl.pallas_call(
            _stft_resize_norm_kernel,
            out_shape=jax.ShapeDtypeStruct((B, 3, OUT_HW, OUT_HW), jnp.float32),
            grid=(B,),
            in_specs=[pl.BlockSpec((1, N, Tz), lambda b: (b, 0, 0)),
                      pl.BlockSpec((OUT_HW, N), lambda b: (0, 0)),
                      pl.BlockSpec((OUT_HW, N), lambda b: (0, 0)),
                      pl.BlockSpec((Tz, OUT_HW), lambda b: (0, 0))],
            out_specs=pl.BlockSpec((1, 3, OUT_HW, OUT_HW), lambda b: (b, 0, 0, 0)),
            compiler_params=pltpu.CompilerParams(dimension_semantics=("parallel",)),
        )(frames_t, jnp.asarray(cr), jnp.asarray(ci), jnp.asarray(awt))
        return out


# ---------------------------------- driver -----------------------------------

if __name__ == "__main__":
    B, L = 2, 128
    key = jax.random.PRNGKey(0)
    x = jax.random.normal(key, (B, L), dtype=jnp.float32)

    module = STFT(window_size=32, hop_size=8,
                  ppm_lim="(0.0, 10.0)", t_lim="(0.0, 0.05)")

    fs = 2000.0          # sampling frequency [Hz]
    larmorfreq = 127.7   # larmor frequency [MHz]

    y = module(x, fs, larmorfreq)
    jax.block_until_ready(y)
    assert y.shape == (B, 3, OUT_HW, OUT_HW) and y.dtype == jnp.float32
    assert bool(jnp.all(jnp.isfinite(y)))
    print("KERNEL_OK")
</pallas_src>

<mosaic_0001>
module attributes {stable_mosaic.version = 11 : i64} {
  func.func @_stft_resize_norm_kernel(%arg0: i32, %arg1: memref<1x32x13xf32, #tpu.memory_space<vmem>>, %arg2: memref<224x32xf32, #tpu.memory_space<vmem>>, %arg3: memref<224x32xf32, #tpu.memory_space<vmem>>, %arg4: memref<13x224xf32, #tpu.memory_space<vmem>>, %arg5: memref<1x3x224x224xf32, #tpu.memory_space<vmem>>) attributes {dimension_semantics = [#tpu.dimension_semantics<parallel>], iteration_bounds = array<i64: 2>, scalar_prefetch = 0 : i64, scratch_operands = 0 : i64, tpu.core_type = #tpu.core_type<tc>, window_params = [{transform_indices = @transform_0, window_bounds = array<i64: 1, 32, 13>}, {pipeline_mode = #tpu.pipeline_mode<synchronous>, transform_indices = @transform_1, window_bounds = array<i64: 224, 32>}, {pipeline_mode = #tpu.pipeline_mode<synchronous>, transform_indices = @transform_2, window_bounds = array<i64: 224, 32>}, {pipeline_mode = #tpu.pipeline_mode<synchronous>, transform_indices = @transform_3, window_bounds = array<i64: 13, 224>}, {transform_indices = @transform_4, window_bounds = array<i64: 1, 3, 224, 224>}]} {
    %c0 = arith.constant 0 : index
    %c0_0 = arith.constant 0 : index
    %c0_1 = arith.constant 0 : index
    %0 = vector.load %arg1[%c0, %c0_0, %c0_1] : memref<1x32x13xf32, #tpu.memory_space<vmem>>, vector<1x32x13xf32>
    %1 = vector.shape_cast %0 : vector<1x32x13xf32> to vector<32x13xf32>
    %c0_2 = arith.constant 0 : index
    %c0_3 = arith.constant 0 : index
    %2 = vector.load %arg4[%c0_2, %c0_3] : memref<13x224xf32, #tpu.memory_space<vmem>>, vector<13x224xf32>
    %cst = arith.constant dense<0.000000e+00> : vector<32x224xf32>
    %3 = tpu.matmul %1, %2, %cst {dimension_numbers = #tpu.dot_dimension_numbers<[1], [0], [0], [1], [0, 0, 1, 1], [], []>} : vector<32x13xf32>, vector<13x224xf32>, vector<32x224xf32> -> vector<32x224xf32>
    %c0_4 = arith.constant 0 : index
    %c0_5 = arith.constant 0 : index
    %4 = vector.load %arg2[%c0_4, %c0_5] : memref<224x32xf32, #tpu.memory_space<vmem>>, vector<224x32xf32>
    %cst_6 = arith.constant dense<0.000000e+00> : vector<224x224xf32>
    %5 = tpu.matmul %4, %3, %cst_6 {dimension_numbers = #tpu.dot_dimension_numbers<[1], [0], [0], [1], [0, 0, 1, 1], [], []>} : vector<224x32xf32>, vector<32x224xf32>, vector<224x224xf32> -> vector<224x224xf32>
    %c0_7 = arith.constant 0 : index
    %c0_8 = arith.constant 0 : index
    %6 = vector.load %arg3[%c0_7, %c0_8] : memref<224x32xf32, #tpu.memory_space<vmem>>, vector<224x32xf32>
    %cst_9 = arith.constant dense<0.000000e+00> : vector<224x224xf32>
    %7 = tpu.matmul %6, %3, %cst_9 {dimension_numbers = #tpu.dot_dimension_numbers<[1], [0], [0], [1], [0, 0, 1, 1], [], []>} : vector<224x32xf32>, vector<32x224xf32>, vector<224x224xf32> -> vector<224x224xf32>
    %8 = arith.mulf %5, %5 : vector<224x224xf32>
    %9 = arith.mulf %7, %7 : vector<224x224xf32>
    %10 = arith.addf %8, %9 : vector<224x224xf32>
    %11 = math.sqrt %10 : vector<224x224xf32>
    %12 = vector.shape_cast %5 : vector<224x224xf32> to vector<1x224x224xf32>
    %cst_10 = arith.constant dense<0.000000e+00> : vector<1xf32>
    %13 = vector.multi_reduction <add>, %12, %cst_10 [1, 2] : vector<1x224x224xf32> to vector<1xf32>
    %14 = vector.shape_cast %13 : vector<1xf32> to vector<1x1x1xf32>
    %15 = vector.extract %14[0, 0, 0] : f32 from vector<1x1x1xf32>
    %16 = arith.mulf %5, %5 : vector<224x224xf32>
    %17 = vector.shape_cast %16 : vector<224x224xf32> to vector<1x224x224xf32>
    %cst_11 = arith.constant dense<0.000000e+00> : vector<1xf32>
    %18 = vector.multi_reduction <add>, %17, %cst_11 [1, 2] : vector<1x224x224xf32> to vector<1xf32>
    %19 = vector.shape_cast %18 : vector<1xf32> to vector<1x1x1xf32>
    %20 = vector.extract %19[0, 0, 0] : f32 from vector<1x1x1xf32>
    %cst_12 = arith.constant 5.017600e+04 : f32
    %21 = arith.divf %15, %cst_12 : f32
    %22 = arith.mulf %15, %21 : f32
    %23 = arith.subf %20, %22 : f32
    %cst_13 = arith.constant 5.017500e+04 : f32
    %24 = arith.divf %23, %cst_13 : f32
    %25 = vector.broadcast %21 : f32 to vector<224x224xf32>
    %26 = arith.subf %5, %25 : vector<224x224xf32>
    %27 = math.rsqrt %24 : f32
    %28 = vector.broadcast %27 : f32 to vector<224x224xf32>
    %29 = arith.mulf %26, %28 : vector<224x224xf32>
    %c0_14 = arith.constant 0 : index
    %c0_15 = arith.constant 0 : index
    %c0_16 = arith.constant 0 : index
    %c0_17 = arith.constant 0 : index
    %30 = vector.load %arg5[%c0_14, %c0_15, %c0_16, %c0_17] : memref<1x3x224x224xf32, #tpu.memory_space<vmem>>, vector<1x1x224x224xf32>
    %31 = vector.shape_cast %30 : vector<1x1x224x224xf32> to vector<224x224xf32>
    %32 = vector.shape_cast %29 : vector<224x224xf32> to vector<1x1x224x224xf32>
    tpu.vector_store %arg5[%c0_14, %c0_15, %c0_16, %c0_17], %32 {strides = array<i32>} : memref<1x3x224x224xf32, #tpu.memory_space<vmem>>, vector<1x1x224x224xf32>,
    %33 = vector.shape_cast %7 : vector<224x224xf32> to vector<1x224x224xf32>
    %cst_18 = arith.constant dense<0.000000e+00> : vector<1xf32>
    %34 = vector.multi_reduction <add>, %33, %cst_18 [1, 2] : vector<1x224x224xf32> to vector<1xf32>
    %35 = vector.shape_cast %34 : vector<1xf32> to vector<1x1x1xf32>
    %36 = vector.extract %35[0, 0, 0] : f32 from vector<1x1x1xf32>
    %37 = arith.mulf %7, %7 : vector<224x224xf32>
    %38 = vector.shape_cast %37 : vector<224x224xf32> to vector<1x224x224xf32>
    %cst_19 = arith.constant dense<0.000000e+00> : vector<1xf32>
    %39 = vector.multi_reduction <add>, %38, %cst_19 [1, 2] : vector<1x224x224xf32> to vector<1xf32>
    %40 = vector.shape_cast %39 : vector<1xf32> to vector<1x1x1xf32>
    %41 = vector.extract %40[0, 0, 0] : f32 from vector<1x1x1xf32>
    %cst_20 = arith.constant 5.017600e+04 : f32
    %42 = arith.divf %36, %cst_20 : f32
    %43 = arith.mulf %36, %42 : f32
    %44 = arith.subf %41, %43 : f32
    %cst_21 = arith.constant 5.017500e+04 : f32
    %45 = arith.divf %44, %cst_21 : f32
    %46 = vector.broadcast %42 : f32 to vector<224x224xf32>
    %47 = arith.subf %7, %46 : vector<224x224xf32>
    %48 = math.rsqrt %45 : f32
    %49 = vector.broadcast %48 : f32 to vector<224x224xf32>
    %50 = arith.mulf %47, %49 : vector<224x224xf32>
    %c0_22 = arith.constant 0 : index
    %c1 = arith.constant 1 : index
    %c0_23 = arith.constant 0 : index
    %c0_24 = arith.constant 0 : index
    %51 = vector.load %arg5[%c0_22, %c1, %c0_23, %c0_24] : memref<1x3x224x224xf32, #tpu.memory_space<vmem>>, vector<1x1x224x224xf32>
    %52 = vector.shape_cast %51 : vector<1x1x224x224xf32> to vector<224x224xf32>
    %53 = vector.shape_cast %50 : vector<224x224xf32> to vector<1x1x224x224xf32>
    tpu.vector_store %arg5[%c0_22, %c1, %c0_23, %c0_24], %53 {strides = array<i32>} : memref<1x3x224x224xf32, #tpu.memory_space<vmem>>, vector<1x1x224x224xf32>,
    %54 = vector.shape_cast %11 : vector<224x224xf32> to vector<1x224x224xf32>
    %cst_25 = arith.constant dense<0.000000e+00> : vector<1xf32>
    %55 = vector.multi_reduction <add>, %54, %cst_25 [1, 2] : vector<1x224x224xf32> to vector<1xf32>
    %56 = vector.shape_cast %55 : vector<1xf32> to vector<1x1x1xf32>
    %57 = vector.extract %56[0, 0, 0] : f32 from vector<1x1x1xf32>
    %58 = arith.mulf %11, %11 : vector<224x224xf32>
    %59 = vector.shape_cast %58 : vector<224x224xf32> to vector<1x224x224xf32>
    %cst_26 = arith.constant dense<0.000000e+00> : vector<1xf32>
    %60 = vector.multi_reduction <add>, %59, %cst_26 [1, 2] : vector<1x224x224xf32> to vector<1xf32>
    %61 = vector.shape_cast %60 : vector<1xf32> to vector<1x1x1xf32>
    %62 = vector.extract %61[0, 0, 0] : f32 from vector<1x1x1xf32>
    %cst_27 = arith.constant 5.017600e+04 : f32
    %63 = arith.divf %57, %cst_27 : f32
    %64 = arith.mulf %57, %63 : f32
    %65 = arith.subf %62, %64 : f32
    %cst_28 = arith.constant 5.017500e+04 : f32
    %66 = arith.divf %65, %cst_28 : f32
    %67 = vector.broadcast %63 : f32 to vector<224x224xf32>
    %68 = arith.subf %11, %67 : vector<224x224xf32>
    %69 = math.rsqrt %66 : f32
    %70 = vector.broadcast %69 : f32 to vector<224x224xf32>
    %71 = arith.mulf %68, %70 : vector<224x224xf32>
    %c0_29 = arith.constant 0 : index
    %c2 = arith.constant 2 : index
    %c0_30 = arith.constant 0 : index
    %c0_31 = arith.constant 0 : index
    %72 = vector.load %arg5[%c0_29, %c2, %c0_30, %c0_31] : memref<1x3x224x224xf32, #tpu.memory_space<vmem>>, vector<1x1x224x224xf32>
    %73 = vector.shape_cast %72 : vector<1x1x224x224xf32> to vector<224x224xf32>
    %74 = vector.shape_cast %71 : vector<224x224xf32> to vector<1x1x224x224xf32>
    tpu.vector_store %arg5[%c0_29, %c2, %c0_30, %c0_31], %74 {strides = array<i32>} : memref<1x3x224x224xf32, #tpu.memory_space<vmem>>, vector<1x1x224x224xf32>,
    return
  }
  func.func @transform_0(%arg0: i32) -> (i32, i32, i32) {
    %c0_i32 = arith.constant 0 : i32
    %c0_i32_0 = arith.constant 0 : i32
    %c0_i32_1 = arith.constant 0 : i32
    return %arg0, %c0_i32, %c0_i32_0 : i32, i32, i32
  }
  func.func @transform_1(%arg0: i32) -> (i32, i32) {
    %c0_i32 = arith.constant 0 : i32
    %c0_i32_0 = arith.constant 0 : i32
    %c0_i32_1 = arith.constant 0 : i32
    return %c0_i32, %c0_i32_0 : i32, i32
  }
  func.func @transform_2(%arg0: i32) -> (i32, i32) {
    %c0_i32 = arith.constant 0 : i32
    %c0_i32_0 = arith.constant 0 : i32
    %c0_i32_1 = arith.constant 0 : i32
    return %c0_i32, %c0_i32_0 : i32, i32
  }
  func.func @transform_3(%arg0: i32) -> (i32, i32) {
    %c0_i32 = arith.constant 0 : i32
    %c0_i32_0 = arith.constant 0 : i32
    %c0_i32_1 = arith.constant 0 : i32
    return %c0_i32, %c0_i32_0 : i32, i32
  }
  func.func @transform_4(%arg0: i32) -> (i32, i32, i32, i32) {
    %c0_i32 = arith.constant 0 : i32
    %c0_i32_0 = arith.constant 0 : i32
    %c0_i32_1 = arith.constant 0 : i32
    %c0_i32_2 = arith.constant 0 : i32
    return %arg0, %c0_i32, %c0_i32_0, %c0_i32_1 : i32, i32, i32, i32
  }
}

</mosaic_0001>

<llo_original>
// kernel: tpu_custom_call.1
$region0: #{tpu_custom_call.1}
  #allocation0 [shape = 'u32[]', space=smem, size = 0x4, offset = 0x4, fixed_abs, tag = 'smem constant byte address 0x4 - core index']
  #allocation1 [shape = 'u32[144,128]{1,0:T(1,128)}', space=vmem, size = 0x12000, scoped, tag = 'internal scratch']
  %s0 = inlined_call_operand.vmem [shape: f32[2,32,13], index: 0, kind: input, shape index: {}]
  %s1 = inlined_call_operand.vmem [shape: f32[224,32], index: 1, kind: input, shape index: {}]
  %s2 = inlined_call_operand.vmem [shape: f32[224,32], index: 2, kind: input, shape index: {}]
  %s3 = inlined_call_operand.hbm [shape: f32[13,224], index: 3, kind: input, shape index: {}]
  %s4 = inlined_call_operand.hbm [shape: f32[2,3,224,224], index: 4, kind: output, shape index: {}]
  %s5 = sld [smem:[#allocation0]]
  $region53: #{tpu_custom_call.1} parent=0
    _
  %s7 = ssub.s32 1, %s5
  %s8 = scalar_select 0, %s7, %s5
  $region1: #{tpu_custom_call.1} parent=0
    #allocation2 [shape = 'u8[16384]{0}', space=vmem, size = 0x4000, scoped, tag = 'input window, operand 3, single buffered']
    #allocation3 [shape = 's32[2]{0}', space=sflag, size = 0x8, scoped, tag = 'scoped memory for tpu_custom_call.1']
    #allocation4 [shape = 's32[2]{0}', space=sflag, size = 0x8, scoped, tag = 'scoped memory for tpu_custom_call.1']
    #allocation5 [shape = 'u8[1376256]{0}', space=vmem, size = 0x150000, scoped, tag = 'output window, operand 0']
    %9 = vsyncpa [#allocation3], 0
    %10 = vsyncpa [#allocation4], 0
    %s11 = scalar_lea.sflag [#allocation4], 1
    %12 = vsyncpa %s11, 0
    loop: start=0, step=1, limit=4
    $region2: #{tpu_custom_call.1} parent=1 // loop_pre_header
      _
    $region3: #{tpu_custom_call.1} parent=1 // loop_header
      %s14 = sphi 0, %s18
      %p15 = scmp.ge.s32.totalorder %s14, 4
      %s24 = sphi 0, %s26
      %s27 = sphi 0, %s24
      %s28 = sphi 0, %s27
      %s44 = sphi 0, %s28
      %s48 = sphi 0, %s48
      %s50 = sphi 0, %s48
      %s51 = sphi 0, %s50
      %s65 = sphi 0, %s51
      %s69 = sphi 0, %s69
      %s71 = sphi 0, %s69
      %s72 = sphi 0, %s71
      %s86 = sphi 0, %s72
      %s90 = sphi 0, %s90
      %s92 = sphi 0, %s90
      %s93 = sphi 0, %s92
      %s107 = sphi 0, %s93
      %s113 = sphi 0, %s115
      %s116 = sphi 0, %s113
      %s117 = sphi 0, %s116
      %s133 = sphi 0, %s117
    $region4: #{tpu_custom_call.1} parent=1 // loop_header_branch
      %17 = sbr.rel (%p15) target = $region8
    $region5: #{tpu_custom_call.1} parent=1 // loop_body
      %s19 = ssub.s32 %s14, 1
      %s20 = ssub.s32 %s14, 2
      %s21 = sadd.s32 %s14, 1
      %s22 = ssub.s32 %s14, %s21
      %p23 = scmp.eq.s32.totalorder %s22, 0
      %s25 = sadd.s32 %s24, 1
      %s26 = scalar_select %p23, %s24, %s25
      %p29 = pneg %p23
      %p30 = scmp.eq.s32.totalorder %s14, 1
      %p31 = por %p29, %p30
      %p32 = scmp.ne.s32.totalorder %s24, %s27
      %p33 = scmp.eq.s32.totalorder %s14, 0
      %p34 = por %p32, %p33
      %p35 = scmp.ne.s32.totalorder %s24, %s27
      %p36 = scmp.eq.s32.totalorder %s19, 1
      %p37 = por %p35, %p36
      %p38 = scmp.ne.s32.totalorder %s27, %s28
      %p39 = scmp.eq.s32.totalorder %s19, 0
      %p40 = por %p38, %p39
      %p41 = scmp.ne.s32.totalorder %s27, %s28
      %p42 = scmp.eq.s32.totalorder %s20, 1
      %p43 = por %p41, %p42
      %p45 = scmp.ne.s32.totalorder %s28, %s44
      %p46 = scmp.eq.s32.totalorder %s20, 0
      %p47 = por %p45, %p46
      %s49 = sadd.s32 %s48, 1
      %p52 = scmp.eq.s32.totalorder %s14, 1
      %p53 = scmp.ne.s32.totalorder %s48, %s50
      %p54 = scmp.eq.s32.totalorder %s14, 0
      %p55 = por %p53, %p54
      %p56 = scmp.ne.s32.totalorder %s48, %s50
      %p57 = scmp.eq.s32.totalorder %s19, 1
      %p58 = por %p56, %p57
      %p59 = scmp.ne.s32.totalorder %s50, %s51
      %p60 = scmp.eq.s32.totalorder %s19, 0
      %p61 = por %p59, %p60
      %p62 = scmp.ne.s32.totalorder %s50, %s51
      %p63 = scmp.eq.s32.totalorder %s20, 1
      %p64 = por %p62, %p63
      %p66 = scmp.ne.s32.totalorder %s51, %s65
      %p67 = scmp.eq.s32.totalorder %s20, 0
      %p68 = por %p66, %p67
      %s70 = sadd.s32 %s69, 1
      %p73 = scmp.eq.s32.totalorder %s14, 1
      %p74 = scmp.ne.s32.totalorder %s69, %s71
      %p75 = scmp.eq.s32.totalorder %s14, 0
      %p76 = por %p74, %p75
      %p77 = scmp.ne.s32.totalorder %s69, %s71
      %p78 = scmp.eq.s32.totalorder %s19, 1
      %p79 = por %p77, %p78
      %p80 = scmp.ne.s32.totalorder %s71, %s72
      %p81 = scmp.eq.s32.totalorder %s19, 0
      %p82 = por %p80, %p81
      %p83 = scmp.ne.s32.totalorder %s71, %s72
      %p84 = scmp.eq.s32.totalorder %s20, 1
      %p85 = por %p83, %p84
      %p87 = scmp.ne.s32.totalorder %s72, %s86
      %p88 = scmp.eq.s32.totalorder %s20, 0
      %p89 = por %p87, %p88
      %s91 = sadd.s32 %s90, 1
      %p94 = scmp.eq.s32.totalorder %s14, 1
      %p95 = scmp.ne.s32.totalorder %s90, %s92
      %p96 = scmp.eq.s32.totalorder %s14, 0
      %p97 = por %p95, %p96
      %p98 = scmp.ne.s32.totalorder %s90, %s92
      %p99 = scmp.eq.s32.totalorder %s19, 1
      %p100 = por %p98, %p99
      %p101 = scmp.ne.s32.totalorder %s92, %s93
      %p102 = scmp.eq.s32.totalorder %s19, 0
      %p103 = por %p101, %p102
      %p104 = scmp.ne.s32.totalorder %s92, %s93
      %p105 = scmp.eq.s32.totalorder %s20, 1
      %p106 = por %p104, %p105
      %p108 = scmp.ne.s32.totalorder %s93, %s107
      %p109 = scmp.eq.s32.totalorder %s20, 0
      %p110 = por %p108, %p109
      %s111 = ssub.s32 %s14, %s21
      %p112 = scmp.eq.s32.totalorder %s111, 0
      %s114 = sadd.s32 %s113, 1
      %s115 = scalar_select %p112, %s113, %s114
      %p118 = pneg %p112
      %p119 = scmp.eq.s32.totalorder %s14, 1
      %p120 = por %p118, %p119
      %p121 = scmp.ne.s32.totalorder %s113, %s116
      %p122 = scmp.eq.s32.totalorder %s14, 0
      %p123 = por %p121, %p122
      %p124 = scmp.ne.s32.totalorder %s113, %s116
      %p125 = scmp.eq.s32.totalorder %s19, 1
      %p126 = por %p124, %p125
      %p127 = scmp.ne.s32.totalorder %s116, %s117
      %p128 = scmp.eq.s32.totalorder %s19, 0
      %p129 = por %p127, %p128
      %p130 = scmp.ne.s32.totalorder %s116, %s117
      %p131 = scmp.eq.s32.totalorder %s20, 1
      %p132 = por %p130, %p131
      %p134 = scmp.ne.s32.totalorder %s117, %s133
      %p135 = scmp.eq.s32.totalorder %s20, 0
      %p136 = por %p134, %p135
      %p137 = scmp.le.s32.totalorder 1, %s14
      %p138 = scmp.lt.s32.totalorder %s14, 3
      %p139 = pnand %p137, %p138
      %p140 = pneg %p139
      // Predicated region
      $region9: #{tpu_custom_call.1} parent=5 // pred_check
        _
      $region10: #{tpu_custom_call.1} parent=5 // pred_check_branch
        %142 = sbr.rel (%p139) target = $region12
      $region11: #{tpu_custom_call.1} parent=5 // pred_region
        %s143 = ssub.s32 %s14, 1
        // Predicated region
        $region13: #{tpu_custom_call.1} parent=11 // pred_check
          %p144 = pneg %p61
        $region14: #{tpu_custom_call.1} parent=11 // pred_check_branch
          %146 = sbr.rel (%p144) target = $region16
        $region15: #{tpu_custom_call.1} parent=11 // pred_region
          _
        $region16: #{tpu_custom_call.1} parent=11 // pred_fallthru
          _
        // Predicated region
        $region17: #{tpu_custom_call.1} parent=11 // pred_check
          %p147 = pneg %p82
        $region18: #{tpu_custom_call.1} parent=11 // pred_check_branch
          %149 = sbr.rel (%p147) target = $region20
        $region19: #{tpu_custom_call.1} parent=11 // pred_region
          _
        $region20: #{tpu_custom_call.1} parent=11 // pred_fallthru
          _
        // Predicated region
        $region21: #{tpu_custom_call.1} parent=11 // pred_check
          %p150 = pneg %p103
        $region22: #{tpu_custom_call.1} parent=11 // pred_check_branch
          %152 = sbr.rel (%p150) target = $region24
        $region23: #{tpu_custom_call.1} parent=11 // pred_region
          %s154 = ssub.s32 512, 512
          %155 = vsyncadd [#allocation3], %s154
          %s156 = sshll.u32 [#allocation2], 4
          %s157 = int_to_ptr.vmem [resolvable:$true] %s156
          %162 = dma.hbm_to_vmem [thread:$0]  %s3, 512, %s157, [#allocation3], 256, 256, 16
        $region24: #{tpu_custom_call.1} parent=11 // pred_fallthru
          _
      $region12: #{tpu_custom_call.1} parent=5 // pred_fallthru
        _
      %p163 = scmp.lt.s32.totalorder %s14, 2
      // Predicated region
      $region25: #{tpu_custom_call.1} parent=5 // pred_check
        %p164 = pneg %p163
      $region26: #{tpu_custom_call.1} parent=5 // pred_check_branch
        %166 = sbr.rel (%p164) target = $region28
      $region27: #{tpu_custom_call.1} parent=5 // pred_region
        // Predicated region
        $region29: #{tpu_custom_call.1} parent=27 // pred_check
          %p167 = pneg %p34
        $region30: #{tpu_custom_call.1} parent=27 // pred_check_branch
          %169 = sbr.rel (%p167) target = $region32
        $region31: #{tpu_custom_call.1} parent=27 // pred_region
          %p170 = scmp.lt.s32.totalorder %s14, 1
          %s171 = scalar_select %p170, %s14, 1
          %s172 = smul.addr %s171, 4
          %s173 = smul.addr %s172, 8
          %s174 = scalar_lea.vmem %s0, %s173
        $region32: #{tpu_custom_call.1} parent=27 // pred_fallthru
          _
      $region28: #{tpu_custom_call.1} parent=5 // pred_fallthru
        _
      %p175 = scmp.le.s32.totalorder 1, %s14
      %p176 = scmp.lt.s32.totalorder %s14, 3
      %p177 = pnand %p175, %p176
      %p178 = pneg %p177
      // Predicated region
      $region33: #{tpu_custom_call.1} parent=5 // pred_check
        _
      $region34: #{tpu_custom_call.1} parent=5 // pred_check_branch
        %180 = sbr.rel (%p177) target = $region36
      $region35: #{tpu_custom_call.1} parent=5 // pred_region
        %s181 = ssub.s32 %s14, 1
        // Predicated region
        $region37: #{tpu_custom_call.1} parent=35 // pred_check
          %p182 = pneg %p103
        $region38: #{tpu_custom_call.1} parent=35 // pred_check_branch
          %184 = sbr.rel (%p182) target = $region40
        $region39: #{tpu_custom_call.1} parent=35 // pred_region
          %185 = dma.done [#allocation3], 512
        $region40: #{tpu_custom_call.1} parent=35 // pred_fallthru
          _
        %p186 = scmp.lt.s32.totalorder %s19, 1
        %s187 = scalar_select %p186, %s19, 1
        %s188 = smul.addr %s187, 4
        %s189 = smul.addr %s188, 8
        %s190 = scalar_lea.vmem %s0, %s189
        %p191 = pneg %p40
        %p192 = pneg %p37
        %p193 = pneg %p61
        %p194 = pneg %p58
        %p195 = pneg %p82
        %p196 = pneg %p79
        %p197 = pneg %p103
        %p198 = pneg %p100
        %p199 = pneg %p129
        %p200 = pneg %p126
        %s201 = sand.u32 %s116, 1
        %s202 = scalar_lea.sflag [#allocation4], %s201
        %s203 = sand.u32 %s116, 1
        %s204 = smul.addr %s203, 1344
        %s205 = scalar_lea.vmem [#allocation5], %s204
        %p206 = scmp.lt.s32.totalorder %s19, 1
        %s207 = scalar_select %p206, %s19, 1
        %s208 = smul.addr %s207, 4
        %s209 = smul.addr %s208, 8
        %s210 = scalar_lea.vmem %s0, %s209
        %v211 = vld [vmem:[%s210] sm:$0xff]
        %v212 = vld [vmem:[%s210 + $0x8] sm:$0xff]
        %v213 = vld [vmem:[%s210 + $0x10] sm:$0xff]
        %v214 = vld [vmem:[%s210 + $0x18] sm:$0xff]
        %v215 = vld [vmem:[#allocation2] sm:$0xff]
        %v216 = vld [vmem:[#allocation2 + $0x8] sm:$0xff]
        %v217 = vld [vmem:[#allocation2 + $0x10] sm:$0x1f]
        %v218 = vld [vmem:[#allocation2 + $0x18] sm:$0x1f]
        %vm219 = vcmask 105472
        %v221 = vsel %vm219, %v211, 0
        %v224 = vsel %vm219, %v212, 0
        %v227 = vsel %vm219, %v213, 0
        %v230 = vsel %vm219, %v214, 0
        %vm232 = vcmask 1044480
        %v234 = vsel %vm232, %v217, 0
        %v237 = vsel %vm232, %v218, 0
        %239 = vmatprep.subr.mxu0 %v216
        %240 = vmatpush1.msra.mxu0 %v215
        %241 = vmatprep.subr.mxu0 %v237
        %242 = vmatpush1.msra.mxu0 %v234
        %243 = vmatprep.subr.mxu0 0.0
        %244 = vmatpush1.msra.mxu0 0.0
        %245 = vmatprep.subr.mxu0 0.0
        %246 = vmatpush1.msra.mxu0 0.0
        %247 = vmatprep.subr.mxu0 0.0
        %248 = vmatpush1.msra.mxu0 0.0
        %249 = vmatprep.subr.mxu0 0.0
        %250 = vmatpush1.msra.mxu0 0.0
        %251 = vmatprep.subr.mxu0 0.0
        %252 = vmatpush1.msra.mxu0 0.0
        %253 = vmatprep.subr.mxu0 0.0
        %254 = vmatpush1.msra.mxu0 0.0
        %255 = vmatprep.subr.mxu0 0.0
        %256 = vmatpush1.msra.mxu0 0.0
        %257 = vmatprep.subr.mxu0 0.0
        %258 = vmatpush1.msra.mxu0 0.0
        %259 = vmatprep.subr.mxu0 0.0
        %260 = vmatpush1.msra.mxu0 0.0
        %261 = vmatprep.subr.mxu0 0.0
        %262 = vmatpush1.msra.mxu0 0.0
        %263 = vmatprep.subr.mxu0 0.0
        %264 = vmatpush1.msra.mxu0 0.0
        %265 = vmatprep.subr.mxu0 0.0
        %266 = vmatpush1.msra.mxu0 0.0
        %267 = vmatprep.subr.mxu0 0.0
        %268 = vmatpush1.msra.mxu0 0.0
        %269 = vmatprep.subr.mxu0 0.0
        %270 = vmatpush1.msra.mxu0 0.0
        %271 = vmatprep.subr.mxu0 0.0
        %272 = vmatpush1.msra.mxu0 0.0
        %273 = vmatprep.subr.mxu0 0.0
        %274 = vmatpush1.msra.mxu0 0.0
        %275 = vmatprep.subr.mxu0 0.0
        %276 = vmatpush1.msra.mxu0 0.0
        %277 = vmatprep.subr.mxu0 0.0
        %278 = vmatpush1.msra.mxu0 0.0
        %279 = vmatprep.subr.mxu0 0.0
        %280 = vmatpush1.msra.mxu0 0.0
        %281 = vmatprep.subr.mxu0 0.0
        %282 = vmatpush1.msra.mxu0 0.0
        %283 = vmatprep.subr.mxu0 0.0
        %284 = vmatpush1.msra.mxu0 0.0
        %285 = vmatprep.subr.mxu0 0.0
        %286 = vmatpush1.msra.mxu0 0.0
        %287 = vmatprep.subr.mxu0 0.0
        %288 = vmatpush1.msra.mxu0 0.0
        %289 = vmatprep.subr.mxu0 0.0
        %290 = vmatpush1.msra.mxu0 0.0
        %291 = vmatprep.subr.mxu0 0.0
        %292 = vmatpush1.msra.mxu0 0.0
        %293 = vmatprep.subr.mxu0 0.0
        %294 = vmatpush1.msra.mxu0 0.0
        %295 = vmatprep.subr.mxu0 0.0
        %296 = vmatpush1.msra.mxu0 0.0
        %297 = vmatprep.subr.mxu0 0.0
        %298 = vmatpush1.msra.mxu0 0.0
        %299 = vmatprep.subr.mxu0 0.0
        %300 = vmatpush1.msra.mxu0 0.0
        %301 = vmatprep.subr.mxu0 0.0
        %302 = vmatpush1.msra.mxu0 0.0
        %303 = vmatprep.mubr.f32.mxu0 0.0
        %304 = vmatmul.mubr.f32.gmra.mrb[0].mxu0 %v221
        %v305 = vpop.f32.mrb[0].mxu0
        %v306 = vadd.f32 0.0, %v305
        %v307 = vpop.f32.mrb[0].mxu0
        %v308 = vadd.f32 0.0, %v307
        %309 = vmatprep.mubr.f32.mxu0 0.0
        %310 = vmatmul.mubr.f32.gmra.mrb[0].mxu0 %v224
        %v311 = vpop.f32.mrb[0].mxu0
        %v312 = vadd.f32 0.0, %v311
        %v313 = vpop.f32.mrb[0].mxu0
        %v314 = vadd.f32 0.0, %v313
        %315 = vmatprep.mubr.f32.mxu0 0.0
        %316 = vmatmul.mubr.f32.gmra.mrb[0].mxu0 %v227
        %v317 = vpop.f32.mrb[0].mxu0
        %v318 = vadd.f32 0.0, %v317
        %v319 = vpop.f32.mrb[0].mxu0
        %v320 = vadd.f32 0.0, %v319
        %321 = vmatprep.mubr.f32.mxu0 0.0
        %322 = vmatmul.mubr.f32.gmra.mrb[0].mxu0 %v230
        %v323 = vpop.f32.mrb[0].mxu0
        %v324 = vadd.f32 0.0, %v323
        %v325 = vpop.f32.mrb[0].mxu0
        %v326 = vadd.f32 0.0, %v325
        %327 = vdwg.mxu0
        %v328 = vld [vmem:[%s1] sm:$0xff]
        %v329 = vld [vmem:[%s1 + $0x8] sm:$0xff]
        %v330 = vld [vmem:[%s1 + $0x10] sm:$0xff]
        %v331 = vld [vmem:[%s1 + $0x18] sm:$0xff]
        %v332 = vld [vmem:[%s1 + $0x20] sm:$0xff]
        %v333 = vld [vmem:[%s1 + $0x28] sm:$0xff]
        %v334 = vld [vmem:[%s1 + $0x30] sm:$0xff]
        %v335 = vld [vmem:[%s1 + $0x38] sm:$0xff]
        %v336 = vld [vmem:[%s1 + $0x40] sm:$0xff]
        %v337 = vld [vmem:[%s1 + $0x48] sm:$0xff]
        %v338 = vld [vmem:[%s1 + $0x50] sm:$0xff]
        %v339 = vld [vmem:[%s1 + $0x58] sm:$0xff]
        %v340 = vld [vmem:[%s1 + $0x60] sm:$0xff]
        %v341 = vld [vmem:[%s1 + $0x68] sm:$0xff]
        %v342 = vld [vmem:[%s1 + $0x70] sm:$0xff]
        %v343 = vld [vmem:[%s1 + $0x78] sm:$0xff]
        %v344 = vld [vmem:[%s1 + $0x80] sm:$0xff]
        %v345 = vld [vmem:[%s1 + $0x88] sm:$0xff]
        %v346 = vld [vmem:[%s1 + $0x90] sm:$0xff]
        %v347 = vld [vmem:[%s1 + $0x98] sm:$0xff]
        %v348 = vld [vmem:[%s1 + $0xa0] sm:$0xff]
        %v349 = vld [vmem:[%s1 + $0xa8] sm:$0xff]
        %v350 = vld [vmem:[%s1 + $0xb0] sm:$0xff]
        %v351 = vld [vmem:[%s1 + $0xb8] sm:$0xff]
        %v352 = vld [vmem:[%s1 + $0xc0] sm:$0xff]
        %v353 = vld [vmem:[%s1 + $0xc8] sm:$0xff]
        %v354 = vld [vmem:[%s1 + $0xd0] sm:$0xff]
        %v355 = vld [vmem:[%s1 + $0xd8] sm:$0xff]
        %vm356 = vcmask 261120
        %v358 = vsel %vm356, %v328, 0
        %v361 = vsel %vm356, %v329, 0
        %v364 = vsel %vm356, %v330, 0
        %v367 = vsel %vm356, %v331, 0
        %v370 = vsel %vm356, %v332, 0
        %v373 = vsel %vm356, %v333, 0
        %v376 = vsel %vm356, %v334, 0
        %v379 = vsel %vm356, %v335, 0
        %v382 = vsel %vm356, %v336, 0
        %v385 = vsel %vm356, %v337, 0
        %v388 = vsel %vm356, %v338, 0
        %v391 = vsel %vm356, %v339, 0
        %v394 = vsel %vm356, %v340, 0
        %v397 = vsel %vm356, %v341, 0
        %v400 = vsel %vm356, %v342, 0
        %v403 = vsel %vm356, %v343, 0
        %v406 = vsel %vm356, %v344, 0
        %v409 = vsel %vm356, %v345, 0
        %v412 = vsel %vm356, %v346, 0
        %v415 = vsel %vm356, %v347, 0
        %v418 = vsel %vm356, %v348, 0
        %v421 = vsel %vm356, %v349, 0
        %v424 = vsel %vm356, %v350, 0
        %v427 = vsel %vm356, %v351, 0
        %v430 = vsel %vm356, %v352, 0
        %v433 = vsel %vm356, %v353, 0
        %v436 = vsel %vm356, %v354, 0
        %v439 = vsel %vm356, %v355, 0
        %441 = vmatprep.subr.mxu0 %v308
        %442 = vmatpush1.msra.mxu0 %v306
        %443 = vmatprep.subr.mxu0 %v314
        %444 = vmatpush1.msra.mxu0 %v312
        %445 = vmatprep.subr.mxu0 %v320
        %446 = vmatpush1.msra.mxu0 %v318
        %447 = vmatprep.subr.mxu0 %v326
        %448 = vmatpush1.msra.mxu0 %v324
        %449 = vmatprep.subr.mxu0 0.0
        %450 = vmatpush1.msra.mxu0 0.0
        %451 = vmatprep.subr.mxu0 0.0
        %452 = vmatpush1.msra.mxu0 0.0
        %453 = vmatprep.subr.mxu0 0.0
        %454 = vmatpush1.msra.mxu0 0.0
        %455 = vmatprep.subr.mxu0 0.0
        %456 = vmatpush1.msra.mxu0 0.0
        %457 = vmatprep.subr.mxu0 0.0
        %458 = vmatpush1.msra.mxu0 0.0
        %459 = vmatprep.subr.mxu0 0.0
        %460 = vmatpush1.msra.mxu0 0.0
        %461 = vmatprep.subr.mxu0 0.0
        %462 = vmatpush1.msra.mxu0 0.0
        %463 = vmatprep.subr.mxu0 0.0
        %464 = vmatpush1.msra.mxu0 0.0
        %465 = vmatprep.subr.mxu0 0.0
        %466 = vmatpush1.msra.mxu0 0.0
        %467 = vmatprep.subr.mxu0 0.0
        %468 = vmatpush1.msra.mxu0 0.0
        %469 = vmatprep.subr.mxu0 0.0
        %470 = vmatpush1.msra.mxu0 0.0
        %471 = vmatprep.subr.mxu0 0.0
        %472 = vmatpush1.msra.mxu0 0.0
        %473 = vmatprep.subr.mxu0 0.0
        %474 = vmatpush1.msra.mxu0 0.0
        %475 = vmatprep.subr.mxu0 0.0
        %476 = vmatpush1.msra.mxu0 0.0
        %477 = vmatprep.subr.mxu0 0.0
        %478 = vmatpush1.msra.mxu0 0.0
        %479 = vmatprep.subr.mxu0 0.0
        %480 = vmatpush1.msra.mxu0 0.0
        %481 = vmatprep.subr.mxu0 0.0
        %482 = vmatpush1.msra.mxu0 0.0
        %483 = vmatprep.subr.mxu0 0.0
        %484 = vmatpush1.msra.mxu0 0.0
        %485 = vmatprep.subr.mxu0 0.0
        %486 = vmatpush1.msra.mxu0 0.0
        %487 = vmatprep.subr.mxu0 0.0
        %488 = vmatpush1.msra.mxu0 0.0
        %489 = vmatprep.subr.mxu0 0.0
        %490 = vmatpush1.msra.mxu0 0.0
        %491 = vmatprep.subr.mxu0 0.0
        %492 = vmatpush1.msra.mxu0 0.0
        %493 = vmatprep.subr.mxu0 0.0
        %494 = vmatpush1.msra.mxu0 0.0
        %495 = vmatprep.subr.mxu0 0.0
        %496 = vmatpush1.msra.mxu0 0.0
        %497 = vmatprep.subr.mxu0 0.0
        %498 = vmatpush1.msra.mxu0 0.0
        %499 = vmatprep.subr.mxu0 0.0
        %500 = vmatpush1.msra.mxu0 0.0
        %501 = vmatprep.subr.mxu0 0.0
        %502 = vmatpush1.msra.mxu0 0.0
        %503 = vmatprep.subr.mxu0 0.0
        %504 = vmatpush1.msra.mxu0 0.0
        %505 = vmatprep.mubr.f32.mxu0 0.0
        %506 = vmatmul.mubr.f32.gmra.mrb[0].mxu0 %v358
        %v507 = vpop.f32.mrb[0].mxu0
        %v508 = vadd.f32 0.0, %v507
        %v509 = vpop.f32.mrb[0].mxu0
        %v510 = vadd.f32 0.0, %v509
        %511 = vmatprep.mubr.f32.mxu0 0.0
        %512 = vmatmul.mubr.f32.gmra.mrb[0].mxu0 %v361
        %v513 = vpop.f32.mrb[0].mxu0
        %v514 = vadd.f32 0.0, %v513
        %v515 = vpop.f32.mrb[0].mxu0
        %v516 = vadd.f32 0.0, %v515
        %517 = vmatprep.mubr.f32.mxu0 0.0
        %518 = vmatmul.mubr.f32.gmra.mrb[0].mxu0 %v364
        %v519 = vpop.f32.mrb[0].mxu0
        %v520 = vadd.f32 0.0, %v519
        %v521 = vpop.f32.mrb[0].mxu0
        %v522 = vadd.f32 0.0, %v521
        %523 = vmatprep.mubr.f32.mxu0 0.0
        %524 = vmatmul.mubr.f32.gmra.mrb[0].mxu0 %v367
        %v525 = vpop.f32.mrb[0].mxu0
        %v526 = vadd.f32 0.0, %v525
        %v527 = vpop.f32.mrb[0].mxu0
        %v528 = vadd.f32 0.0, %v527
        %529 = vmatprep.mubr.f32.mxu0 0.0
        %530 = vmatmul.mubr.f32.gmra.mrb[0].mxu0 %v370
        %v531 = vpop.f32.mrb[0].mxu0
        %v532 = vadd.f32 0.0, %v531
        %v533 = vpop.f32.mrb[0].mxu0
        %v534 = vadd.f32 0.0, %v533
        %535 = vmatprep.mubr.f32.mxu0 0.0
        %536 = vmatmul.mubr.f32.gmra.mrb[0].mxu0 %v373
        %v537 = vpop.f32.mrb[0].mxu0
        %v538 = vadd.f32 0.0, %v537
        %v539 = vpop.f32.mrb[0].mxu0
        %v540 = vadd.f32 0.0, %v539
        %541 = vmatprep.mubr.f32.mxu0 0.0
        %542 = vmatmul.mubr.f32.gmra.mrb[0].mxu0 %v376
        %v543 = vpop.f32.mrb[0].mxu0
        %v544 = vadd.f32 0.0, %v543
        %v545 = vpop.f32.mrb[0].mxu0
        %v546 = vadd.f32 0.0, %v545
        %547 = vmatprep.mubr.f32.mxu0 0.0
        %548 = vmatmul.mubr.f32.gmra.mrb[0].mxu0 %v379
        %v549 = vpop.f32.mrb[0].mxu0
        %v550 = vadd.f32 0.0, %v549
        %v551 = vpop.f32.mrb[0].mxu0
        %v552 = vadd.f32 0.0, %v551
        %553 = vmatprep.mubr.f32.mxu0 0.0
        %554 = vmatmul.mubr.f32.gmra.mrb[0].mxu0 %v382
        %v555 = vpop.f32.mrb[0].mxu0
        %v556 = vadd.f32 0.0, %v555
        %v557 = vpop.f32.mrb[0].mxu0
        %v558 = vadd.f32 0.0, %v557
        %559 = vmatprep.mubr.f32.mxu0 0.0
        %560 = vmatmul.mubr.f32.gmra.mrb[0].mxu0 %v385
        %v561 = vpop.f32.mrb[0].mxu0
        %v562 = vadd.f32 0.0, %v561
        %v563 = vpop.f32.mrb[0].mxu0
        %v564 = vadd.f32 0.0, %v563
        %565 = vmatprep.mubr.f32.mxu0 0.0
        %566 = vmatmul.mubr.f32.gmra.mrb[0].mxu0 %v388
        %v567 = vpop.f32.mrb[0].mxu0
        %v568 = vadd.f32 0.0, %v567
        %v569 = vpop.f32.mrb[0].mxu0
        %v570 = vadd.f32 0.0, %v569
        %571 = vmatprep.mubr.f32.mxu0 0.0
        %572 = vmatmul.mubr.f32.gmra.mrb[0].mxu0 %v391
        %v573 = vpop.f32.mrb[0].mxu0
        %v574 = vadd.f32 0.0, %v573
        %v575 = vpop.f32.mrb[0].mxu0
        %v576 = vadd.f32 0.0, %v575
        %577 = vmatprep.mubr.f32.mxu0 0.0
        %578 = vmatmul.mubr.f32.gmra.mrb[0].mxu0 %v394
        %v579 = vpop.f32.mrb[0].mxu0
        %v580 = vadd.f32 0.0, %v579
        %v581 = vpop.f32.mrb[0].mxu0
        %v582 = vadd.f32 0.0, %v581
        %583 = vmatprep.mubr.f32.mxu0 0.0
        %584 = vmatmul.mubr.f32.gmra.mrb[0].mxu0 %v397
        %v585 = vpop.f32.mrb[0].mxu0
        %v586 = vadd.f32 0.0, %v585
        %v587 = vpop.f32.mrb[0].mxu0
        %v588 = vadd.f32 0.0, %v587
        %589 = vmatprep.mubr.f32.mxu0 0.0
        %590 = vmatmul.mubr.f32.gmra.mrb[0].mxu0 %v400
        %v591 = vpop.f32.mrb[0].mxu0
        %v592 = vadd.f32 0.0, %v591
        %v593 = vpop.f32.mrb[0].mxu0
        %v594 = vadd.f32 0.0, %v593
        %595 = vmatprep.mubr.f32.mxu0 0.0
        %596 = vmatmul.mubr.f32.gmra.mrb[0].mxu0 %v403
        %v597 = vpop.f32.mrb[0].mxu0
        %v598 = vadd.f32 0.0, %v597
        %v599 = vpop.f32.mrb[0].mxu0
        %v600 = vadd.f32 0.0, %v599
        %601 = vmatprep.mubr.f32.mxu0 0.0
        %602 = vmatmul.mubr.f32.gmra.mrb[0].mxu0 %v406
        %v603 = vpop.f32.mrb[0].mxu0
        %v604 = vadd.f32 0.0, %v603
        %v605 = vpop.f32.mrb[0].mxu0
        %v606 = vadd.f32 0.0, %v605
        %607 = vmatprep.mubr.f32.mxu0 0.0
        %608 = vmatmul.mubr.f32.gmra.mrb[0].mxu0 %v409
        %v609 = vpop.f32.mrb[0].mxu0
        %v610 = vadd.f32 0.0, %v609
        %v611 = vpop.f32.mrb[0].mxu0
        %v612 = vadd.f32 0.0, %v611
        %613 = vmatprep.mubr.f32.mxu0 0.0
        %614 = vmatmul.mubr.f32.gmra.mrb[0].mxu0 %v412
        %v615 = vpop.f32.mrb[0].mxu0
        %v616 = vadd.f32 0.0, %v615
        %v617 = vpop.f32.mrb[0].mxu0
        %v618 = vadd.f32 0.0, %v617
        %619 = vmatprep.mubr.f32.mxu0 0.0
        %620 = vmatmul.mubr.f32.gmra.mrb[0].mxu0 %v415
        %v621 = vpop.f32.mrb[0].mxu0
        %v622 = vadd.f32 0.0, %v621
        %v623 = vpop.f32.mrb[0].mxu0
        %v624 = vadd.f32 0.0, %v623
        %625 = vmatprep.mubr.f32.mxu0 0.0
        %626 = vmatmul.mubr.f32.gmra.mrb[0].mxu0 %v418
        %v627 = vpop.f32.mrb[0].mxu0
        %v628 = vadd.f32 0.0, %v627
        %v629 = vpop.f32.mrb[0].mxu0
        %v630 = vadd.f32 0.0, %v629
        %631 = vmatprep.mubr.f32.mxu0 0.0
        %632 = vmatmul.mubr.f32.gmra.mrb[0].mxu0 %v421
        %v633 = vpop.f32.mrb[0].mxu0
        %v634 = vadd.f32 0.0, %v633
        %v635 = vpop.f32.mrb[0].mxu0
        %v636 = vadd.f32 0.0, %v635
        %637 = vmatprep.mubr.f32.mxu0 0.0
        %638 = vmatmul.mubr.f32.gmra.mrb[0].mxu0 %v424
        %v639 = vpop.f32.mrb[0].mxu0
        %v640 = vadd.f32 0.0, %v639
        %v641 = vpop.f32.mrb[0].mxu0
        %v642 = vadd.f32 0.0, %v641
        %643 = vmatprep.mubr.f32.mxu0 0.0
        %644 = vmatmul.mubr.f32.gmra.mrb[0].mxu0 %v427
        %v645 = vpop.f32.mrb[0].mxu0
        %v646 = vadd.f32 0.0, %v645
        %v647 = vpop.f32.mrb[0].mxu0
        %v648 = vadd.f32 0.0, %v647
        %649 = vmatprep.mubr.f32.mxu0 0.0
        %650 = vmatmul.mubr.f32.gmra.mrb[0].mxu0 %v430
        %v651 = vpop.f32.mrb[0].mxu0
        %v652 = vadd.f32 0.0, %v651
        %v653 = vpop.f32.mrb[0].mxu0
        %v654 = vadd.f32 0.0, %v653
        %655 = vmatprep.mubr.f32.mxu0 0.0
        %656 = vmatmul.mubr.f32.gmra.mrb[0].mxu0 %v433
        %v657 = vpop.f32.mrb[0].mxu0
        %v658 = vadd.f32 0.0, %v657
        %v659 = vpop.f32.mrb[0].mxu0
        %v660 = vadd.f32 0.0, %v659
        %661 = vmatprep.mubr.f32.mxu0 0.0
        %662 = vmatmul.mubr.f32.gmra.mrb[0].mxu0 %v436
        %v663 = vpop.f32.mrb[0].mxu0
        %v664 = vadd.f32 0.0, %v663
        %v665 = vpop.f32.mrb[0].mxu0
        %v666 = vadd.f32 0.0, %v665
        %667 = vmatprep.mubr.f32.mxu0 0.0
        %668 = vmatmul.mubr.f32.gmra.mrb[0].mxu0 %v439
        %v669 = vpop.f32.mrb[0].mxu0
        %v670 = vadd.f32 0.0, %v669
        %v671 = vpop.f32.mrb[0].mxu0
        %v672 = vadd.f32 0.0, %v671
        %673 = vdwg.mxu0
        %v674 = vld [vmem:[%s2] sm:$0xff]
        %v675 = vld [vmem:[%s2 + $0x8] sm:$0xff]
        %v676 = vld [vmem:[%s2 + $0x10] sm:$0xff]
        %v677 = vld [vmem:[%s2 + $0x18] sm:$0xff]
        %v678 = vld [vmem:[%s2 + $0x20] sm:$0xff]
        %v679 = vld [vmem:[%s2 + $0x28] sm:$0xff]
        %v680 = vld [vmem:[%s2 + $0x30] sm:$0xff]
        %v681 = vld [vmem:[%s2 + $0x38] sm:$0xff]
        %v682 = vld [vmem:[%s2 + $0x40] sm:$0xff]
        %v683 = vld [vmem:[%s2 + $0x48] sm:$0xff]
        %v684 = vld [vmem:[%s2 + $0x50] sm:$0xff]
        %v685 = vld [vmem:[%s2 + $0x58] sm:$0xff]
        %v686 = vld [vmem:[%s2 + $0x60] sm:$0xff]
        %v687 = vld [vmem:[%s2 + $0x68] sm:$0xff]
        %v688 = vld [vmem:[%s2 + $0x70] sm:$0xff]
        %v689 = vld [vmem:[%s2 + $0x78] sm:$0xff]
        %v690 = vld [vmem:[%s2 + $0x80] sm:$0xff]
        %v691 = vld [vmem:[%s2 + $0x88] sm:$0xff]
        %v692 = vld [vmem:[%s2 + $0x90] sm:$0xff]
        %v693 = vld [vmem:[%s2 + $0x98] sm:$0xff]
        %v694 = vld [vmem:[%s2 + $0xa0] sm:$0xff]
        %v695 = vld [vmem:[%s2 + $0xa8] sm:$0xff]
        %v696 = vld [vmem:[%s2 + $0xb0] sm:$0xff]
        %v697 = vld [vmem:[%s2 + $0xb8] sm:$0xff]
        %v698 = vld [vmem:[%s2 + $0xc0] sm:$0xff]
        %v699 = vld [vmem:[%s2 + $0xc8] sm:$0xff]
        %v700 = vld [vmem:[%s2 + $0xd0] sm:$0xff]
        %v701 = vld [vmem:[%s2 + $0xd8] sm:$0xff]
        %v703 = vsel %vm356, %v674, 0
        %v706 = vsel %vm356, %v675, 0
        %v709 = vsel %vm356, %v676, 0
        %v712 = vsel %vm356, %v677, 0
        %v715 = vsel %vm356, %v678, 0
        %v718 = vsel %vm356, %v679, 0
        %v721 = vsel %vm356, %v680, 0
        %v724 = vsel %vm356, %v681, 0
        %v727 = vsel %vm356, %v682, 0
        %v730 = vsel %vm356, %v683, 0
        %v733 = vsel %vm356, %v684, 0
        %v736 = vsel %vm356, %v685, 0
        %v739 = vsel %vm356, %v686, 0
        %v742 = vsel %vm356, %v687, 0
        %v745 = vsel %vm356, %v688, 0
        %v748 = vsel %vm356, %v689, 0
        %v751 = vsel %vm356, %v690, 0
        %v754 = vsel %vm356, %v691, 0
        %v757 = vsel %vm356, %v692, 0
        %v760 = vsel %vm356, %v693, 0
        %v763 = vsel %vm356, %v694, 0
        %v766 = vsel %vm356, %v695, 0
        %v769 = vsel %vm356, %v696, 0
        %v772 = vsel %vm356, %v697, 0
        %v775 = vsel %vm356, %v698, 0
        %v778 = vsel %vm356, %v699, 0
        %v781 = vsel %vm356, %v700, 0
        %v784 = vsel %vm356, %v701, 0
        %786 = vmatprep.subr.mxu0 %v308
        %787 = vmatpush1.msra.mxu0 %v306
        %788 = vmatprep.subr.mxu0 %v314
        %789 = vmatpush1.msra.mxu0 %v312
        %790 = vmatprep.subr.mxu0 %v320
        %791 = vmatpush1.msra.mxu0 %v318
        %792 = vmatprep.subr.mxu0 %v326
        %793 = vmatpush1.msra.mxu0 %v324
        %794 = vmatprep.subr.mxu0 0.0
        %795 = vmatpush1.msra.mxu0 0.0
        %796 = vmatprep.subr.mxu0 0.0
        %797 = vmatpush1.msra.mxu0 0.0
        %798 = vmatprep.subr.mxu0 0.0
        %799 = vmatpush1.msra.mxu0 0.0
        %800 = vmatprep.subr.mxu0 0.0
        %801 = vmatpush1.msra.mxu0 0.0
        %802 = vmatprep.subr.mxu0 0.0
        %803 = vmatpush1.msra.mxu0 0.0
        %804 = vmatprep.subr.mxu0 0.0
        %805 = vmatpush1.msra.mxu0 0.0
        %806 = vmatprep.subr.mxu0 0.0
        %807 = vmatpush1.msra.mxu0 0.0
        %808 = vmatprep.subr.mxu0 0.0
        %809 = vmatpush1.msra.mxu0 0.0
        %810 = vmatprep.subr.mxu0 0.0
        %811 = vmatpush1.msra.mxu0 0.0
        %812 = vmatprep.subr.mxu0 0.0
        %813 = vmatpush1.msra.mxu0 0.0
        %814 = vmatprep.subr.mxu0 0.0
        %815 = vmatpush1.msra.mxu0 0.0
        %816 = vmatprep.subr.mxu0 0.0
        %817 = vmatpush1.msra.mxu0 0.0
        %818 = vmatprep.subr.mxu0 0.0
        %819 = vmatpush1.msra.mxu0 0.0
        %820 = vmatprep.subr.mxu0 0.0
        %821 = vmatpush1.msra.mxu0 0.0
        %822 = vmatprep.subr.mxu0 0.0
        %823 = vmatpush1.msra.mxu0 0.0
        %824 = vmatprep.subr.mxu0 0.0
        %825 = vmatpush1.msra.mxu0 0.0
        %826 = vmatprep.subr.mxu0 0.0
        %827 = vmatpush1.msra.mxu0 0.0
        %828 = vmatprep.subr.mxu0 0.0
        %829 = vmatpush1.msra.mxu0 0.0
        %830 = vmatprep.subr.mxu0 0.0
        %831 = vmatpush1.msra.mxu0 0.0
        %832 = vmatprep.subr.mxu0 0.0
        %833 = vmatpush1.msra.mxu0 0.0
        %834 = vmatprep.subr.mxu0 0.0
        %835 = vmatpush1.msra.mxu0 0.0
        %836 = vmatprep.subr.mxu0 0.0
        %837 = vmatpush1.msra.mxu0 0.0
        %838 = vmatprep.subr.mxu0 0.0
        %839 = vmatpush1.msra.mxu0 0.0
        %840 = vmatprep.subr.mxu0 0.0
        %841 = vmatpush1.msra.mxu0 0.0
        %842 = vmatprep.subr.mxu0 0.0
        %843 = vmatpush1.msra.mxu0 0.0
        %844 = vmatprep.subr.mxu0 0.0
        %845 = vmatpush1.msra.mxu0 0.0
        %846 = vmatprep.subr.mxu0 0.0
        %847 = vmatpush1.msra.mxu0 0.0
        %848 = vmatprep.subr.mxu0 0.0
        %849 = vmatpush1.msra.mxu0 0.0
        %850 = vmatprep.mubr.f32.mxu0 0.0
        %851 = vmatmul.mubr.f32.gmra.mrb[0].mxu0 %v703
        %v852 = vpop.f32.mrb[0].mxu0
        %v853 = vadd.f32 0.0, %v852
        %v854 = vpop.f32.mrb[0].mxu0
        %v855 = vadd.f32 0.0, %v854
        %856 = vmatprep.mubr.f32.mxu0 0.0
        %857 = vmatmul.mubr.f32.gmra.mrb[0].mxu0 %v706
        %v858 = vpop.f32.mrb[0].mxu0
        %v859 = vadd.f32 0.0, %v858
        %v860 = vpop.f32.mrb[0].mxu0
        %v861 = vadd.f32 0.0, %v860
        %862 = vmatprep.mubr.f32.mxu0 0.0
        %863 = vmatmul.mubr.f32.gmra.mrb[0].mxu0 %v709
        %v864 = vpop.f32.mrb[0].mxu0
        %v865 = vadd.f32 0.0, %v864
        %v866 = vpop.f32.mrb[0].mxu0
        %v867 = vadd.f32 0.0, %v866
        %868 = vmatprep.mubr.f32.mxu0 0.0
        %869 = vmatmul.mubr.f32.gmra.mrb[0].mxu0 %v712
        %v870 = vpop.f32.mrb[0].mxu0
        %v871 = vadd.f32 0.0, %v870
        %v872 = vpop.f32.mrb[0].mxu0
        %v873 = vadd.f32 0.0, %v872
        %874 = vmatprep.mubr.f32.mxu0 0.0
        %875 = vmatmul.mubr.f32.gmra.mrb[0].mxu0 %v715
        %v876 = vpop.f32.mrb[0].mxu0
        %v877 = vadd.f32 0.0, %v876
        %v878 = vpop.f32.mrb[0].mxu0
        %v879 = vadd.f32 0.0, %v878
        %880 = vmatprep.mubr.f32.mxu0 0.0
        %881 = vmatmul.mubr.f32.gmra.mrb[0].mxu0 %v718
        %v882 = vpop.f32.mrb[0].mxu0
        %v883 = vadd.f32 0.0, %v882
        %v884 = vpop.f32.mrb[0].mxu0
        %v885 = vadd.f32 0.0, %v884
        %886 = vmatprep.mubr.f32.mxu0 0.0
        %887 = vmatmul.mubr.f32.gmra.mrb[0].mxu0 %v721
        %v888 = vpop.f32.mrb[0].mxu0
        %v889 = vadd.f32 0.0, %v888
        %v890 = vpop.f32.mrb[0].mxu0
        %v891 = vadd.f32 0.0, %v890
        %892 = vmatprep.mubr.f32.mxu0 0.0
        %893 = vmatmul.mubr.f32.gmra.mrb[0].mxu0 %v724
        %v894 = vpop.f32.mrb[0].mxu0
        %v895 = vadd.f32 0.0, %v894
        %v896 = vpop.f32.mrb[0].mxu0
        %v897 = vadd.f32 0.0, %v896
        %898 = vmatprep.mubr.f32.mxu0 0.0
        %899 = vmatmul.mubr.f32.gmra.mrb[0].mxu0 %v727
        %v900 = vpop.f32.mrb[0].mxu0
        %v901 = vadd.f32 0.0, %v900
        %v902 = vpop.f32.mrb[0].mxu0
        %v903 = vadd.f32 0.0, %v902
        %904 = vmatprep.mubr.f32.mxu0 0.0
        %905 = vmatmul.mubr.f32.gmra.mrb[0].mxu0 %v730
        %v906 = vpop.f32.mrb[0].mxu0
        %v907 = vadd.f32 0.0, %v906
        %v908 = vpop.f32.mrb[0].mxu0
        %v909 = vadd.f32 0.0, %v908
        %910 = vmatprep.mubr.f32.mxu0 0.0
        %911 = vmatmul.mubr.f32.gmra.mrb[0].mxu0 %v733
        %v912 = vpop.f32.mrb[0].mxu0
        %v913 = vadd.f32 0.0, %v912
        %v914 = vpop.f32.mrb[0].mxu0
        %v915 = vadd.f32 0.0, %v914
        %916 = vmatprep.mubr.f32.mxu0 0.0
        %917 = vmatmul.mubr.f32.gmra.mrb[0].mxu0 %v736
        %v918 = vpop.f32.mrb[0].mxu0
        %v919 = vadd.f32 0.0, %v918
        %v920 = vpop.f32.mrb[0].mxu0
        %v921 = vadd.f32 0.0, %v920
        %922 = vmatprep.mubr.f32.mxu0 0.0
        %923 = vmatmul.mubr.f32.gmra.mrb[0].mxu0 %v739
        %v924 = vpop.f32.mrb[0].mxu0
        %v925 = vadd.f32 0.0, %v924
        %v926 = vpop.f32.mrb[0].mxu0
        %v927 = vadd.f32 0.0, %v926
        %928 = vmatprep.mubr.f32.mxu0 0.0
        %929 = vmatmul.mubr.f32.gmra.mrb[0].mxu0 %v742
        %v930 = vpop.f32.mrb[0].mxu0
        %v931 = vadd.f32 0.0, %v930
        %v932 = vpop.f32.mrb[0].mxu0
        %v933 = vadd.f32 0.0, %v932
        %934 = vmatprep.mubr.f32.mxu0 0.0
        %935 = vmatmul.mubr.f32.gmra.mrb[0].mxu0 %v745
        %v936 = vpop.f32.mrb[0].mxu0
        %v937 = vadd.f32 0.0, %v936
        %v938 = vpop.f32.mrb[0].mxu0
        %v939 = vadd.f32 0.0, %v938
        %940 = vmatprep.mubr.f32.mxu0 0.0
        %941 = vmatmul.mubr.f32.gmra.mrb[0].mxu0 %v748
        %v942 = vpop.f32.mrb[0].mxu0
        %v943 = vadd.f32 0.0, %v942
        %v944 = vpop.f32.mrb[0].mxu0
        %v945 = vadd.f32 0.0, %v944
        %946 = vmatprep.mubr.f32.mxu0 0.0
        %947 = vmatmul.mubr.f32.gmra.mrb[0].mxu0 %v751
        %v948 = vpop.f32.mrb[0].mxu0
        %v949 = vadd.f32 0.0, %v948
        %v950 = vpop.f32.mrb[0].mxu0
        %v951 = vadd.f32 0.0, %v950
        %952 = vmatprep.mubr.f32.mxu0 0.0
        %953 = vmatmul.mubr.f32.gmra.mrb[0].mxu0 %v754
        %v954 = vpop.f32.mrb[0].mxu0
        %v955 = vadd.f32 0.0, %v954
        %v956 = vpop.f32.mrb[0].mxu0
        %v957 = vadd.f32 0.0, %v956
        %958 = vmatprep.mubr.f32.mxu0 0.0
        %959 = vmatmul.mubr.f32.gmra.mrb[0].mxu0 %v757
        %v960 = vpop.f32.mrb[0].mxu0
        %v961 = vadd.f32 0.0, %v960
        %v962 = vpop.f32.mrb[0].mxu0
        %v963 = vadd.f32 0.0, %v962
        %964 = vmatprep.mubr.f32.mxu0 0.0
        %965 = vmatmul.mubr.f32.gmra.mrb[0].mxu0 %v760
        %v966 = vpop.f32.mrb[0].mxu0
        %v967 = vadd.f32 0.0, %v966
        %v968 = vpop.f32.mrb[0].mxu0
        %v969 = vadd.f32 0.0, %v968
        %970 = vmatprep.mubr.f32.mxu0 0.0
        %971 = vmatmul.mubr.f32.gmra.mrb[0].mxu0 %v763
        %v972 = vpop.f32.mrb[0].mxu0
        %v973 = vadd.f32 0.0, %v972
        %v974 = vpop.f32.mrb[0].mxu0
        %v975 = vadd.f32 0.0, %v974
        %976 = vmatprep.mubr.f32.mxu0 0.0
        %977 = vmatmul.mubr.f32.gmra.mrb[0].mxu0 %v766
        %v978 = vpop.f32.mrb[0].mxu0
        %v979 = vadd.f32 0.0, %v978
        %v980 = vpop.f32.mrb[0].mxu0
        %v981 = vadd.f32 0.0, %v980
        %982 = vmatprep.mubr.f32.mxu0 0.0
        %983 = vmatmul.mubr.f32.gmra.mrb[0].mxu0 %v769
        %v984 = vpop.f32.mrb[0].mxu0
        %v985 = vadd.f32 0.0, %v984
        %v986 = vpop.f32.mrb[0].mxu0
        %v987 = vadd.f32 0.0, %v986
        %988 = vmatprep.mubr.f32.mxu0 0.0
        %989 = vmatmul.mubr.f32.gmra.mrb[0].mxu0 %v772
        %v990 = vpop.f32.mrb[0].mxu0
        %v991 = vadd.f32 0.0, %v990
        %v992 = vpop.f32.mrb[0].mxu0
        %v993 = vadd.f32 0.0, %v992
        %994 = vmatprep.mubr.f32.mxu0 0.0
        %995 = vmatmul.mubr.f32.gmra.mrb[0].mxu0 %v775
        %v996 = vpop.f32.mrb[0].mxu0
        %v997 = vadd.f32 0.0, %v996
        %v998 = vpop.f32.mrb[0].mxu0
        %v999 = vadd.f32 0.0, %v998
        %1000 = vmatprep.mubr.f32.mxu0 0.0
        %1001 = vmatmul.mubr.f32.gmra.mrb[0].mxu0 %v778
        %v1002 = vpop.f32.mrb[0].mxu0
        %v1003 = vadd.f32 0.0, %v1002
        %v1004 = vpop.f32.mrb[0].mxu0
        %v1005 = vadd.f32 0.0, %v1004
        %1006 = vmatprep.mubr.f32.mxu0 0.0
        %1007 = vmatmul.mubr.f32.gmra.mrb[0].mxu0 %v781
        %v1008 = vpop.f32.mrb[0].mxu0
        %v1009 = vadd.f32 0.0, %v1008
        %v1010 = vpop.f32.mrb[0].mxu0
        %v1011 = vadd.f32 0.0, %v1010
        %1012 = vmatprep.mubr.f32.mxu0 0.0
        %1013 = vmatmul.mubr.f32.gmra.mrb[0].mxu0 %v784
        %v1014 = vpop.f32.mrb[0].mxu0
        %v1015 = vadd.f32 0.0, %v1014
        %v1016 = vpop.f32.mrb[0].mxu0
        %v1017 = vadd.f32 0.0, %v1016
        %1018 = vdwg.mxu0
        %v1019 = vmul.f32 %v508, %v508
        %v1020 = vmul.f32 %v510, %v510
        %v1021 = vmul.f32 %v514, %v514
        %v1022 = vmul.f32 %v516, %v516
        %v1023 = vmul.f32 %v520, %v520
        %v1024 = vmul.f32 %v522, %v522
        %v1025 = vmul.f32 %v526, %v526
        %v1026 = vmul.f32 %v528, %v528
        %v1027 = vmul.f32 %v532, %v532
        %v1028 = vmul.f32 %v534, %v534
        %v1029 = vmul.f32 %v538, %v538
        %v1030 = vmul.f32 %v540, %v540
        %v1031 = vmul.f32 %v544, %v544
        %v1032 = vmul.f32 %v546, %v546
        %v1033 = vmul.f32 %v550, %v550
        %v1034 = vmul.f32 %v552, %v552
        %v1035 = vmul.f32 %v556, %v556
        %v1036 = vmul.f32 %v558, %v558
        %v1037 = vmul.f32 %v562, %v562
        %v1038 = vmul.f32 %v564, %v564
        %v1039 = vmul.f32 %v568, %v568
        %v1040 = vmul.f32 %v570, %v570
        %v1041 = vmul.f32 %v574, %v574
        %v1042 = vmul.f32 %v576, %v576
        %v1043 = vmul.f32 %v580, %v580
        %v1044 = vmul.f32 %v582, %v582
        %v1045 = vmul.f32 %v586, %v586
        %v1046 = vmul.f32 %v588, %v588
        %v1047 = vmul.f32 %v592, %v592
        %v1048 = vmul.f32 %v594, %v594
        %v1049 = vmul.f32 %v598, %v598
        %v1050 = vmul.f32 %v600, %v600
        %v1051 = vmul.f32 %v604, %v604
        %v1052 = vmul.f32 %v606, %v606
        %v1053 = vmul.f32 %v610, %v610
        %v1054 = vmul.f32 %v612, %v612
        %v1055 = vmul.f32 %v616, %v616
        %v1056 = vmul.f32 %v618, %v618
        %v1057 = vmul.f32 %v622, %v622
        %v1058 = vmul.f32 %v624, %v624
        %v1059 = vmul.f32 %v628, %v628
        %v1060 = vmul.f32 %v630, %v630
        %v1061 = vmul.f32 %v634, %v634
        %v1062 = vmul.f32 %v636, %v636
        %v1063 = vmul.f32 %v640, %v640
        %v1064 = vmul.f32 %v642, %v642
        %v1065 = vmul.f32 %v646, %v646
        %v1066 = vmul.f32 %v648, %v648
        %v1067 = vmul.f32 %v652, %v652
        %v1068 = vmul.f32 %v654, %v654
        %v1069 = vmul.f32 %v658, %v658
        %v1070 = vmul.f32 %v660, %v660
        %v1071 = vmul.f32 %v664, %v664
        %v1072 = vmul.f32 %v666, %v666
        %v1073 = vmul.f32 %v670, %v670
        %v1074 = vmul.f32 %v672, %v672
        %v1075 = vmul.f32 %v853, %v853
        %v1076 = vmul.f32 %v855, %v855
        %v1077 = vmul.f32 %v859, %v859
        %v1078 = vmul.f32 %v861, %v861
        %v1079 = vmul.f32 %v865, %v865
        %v1080 = vmul.f32 %v867, %v867
        %v1081 = vmul.f32 %v871, %v871
        %v1082 = vmul.f32 %v873, %v873
        %v1083 = vmul.f32 %v877, %v877
        %v1084 = vmul.f32 %v879, %v879
        %v1085 = vmul.f32 %v883, %v883
        %v1086 = vmul.f32 %v885, %v885
        %v1087 = vmul.f32 %v889, %v889
        %v1088 = vmul.f32 %v891, %v891
        %v1089 = vmul.f32 %v895, %v895
        %v1090 = vmul.f32 %v897, %v897
        %v1091 = vmul.f32 %v901, %v901
        %v1092 = vmul.f32 %v903, %v903
        %v1093 = vmul.f32 %v907, %v907
        %v1094 = vmul.f32 %v909, %v909
        %v1095 = vmul.f32 %v913, %v913
        %v1096 = vmul.f32 %v915, %v915
        %v1097 = vmul.f32 %v919, %v919
        %v1098 = vmul.f32 %v921, %v921
        %v1099 = vmul.f32 %v925, %v925
        %v1100 = vmul.f32 %v927, %v927
        %v1101 = vmul.f32 %v931, %v931
        %v1102 = vmul.f32 %v933, %v933
        %v1103 = vmul.f32 %v937, %v937
        %v1104 = vmul.f32 %v939, %v939
        %v1105 = vmul.f32 %v943, %v943
        %v1106 = vmul.f32 %v945, %v945
        %v1107 = vmul.f32 %v949, %v949
        %v1108 = vmul.f32 %v951, %v951
        %v1109 = vmul.f32 %v955, %v955
        %v1110 = vmul.f32 %v957, %v957
        %v1111 = vmul.f32 %v961, %v961
        %v1112 = vmul.f32 %v963, %v963
        %v1113 = vmul.f32 %v967, %v967
        %v1114 = vmul.f32 %v969, %v969
        %v1115 = vmul.f32 %v973, %v973
        %v1116 = vmul.f32 %v975, %v975
        %v1117 = vmul.f32 %v979, %v979
        %v1118 = vmul.f32 %v981, %v981
        %v1119 = vmul.f32 %v985, %v985
        %v1120 = vmul.f32 %v987, %v987
        %v1121 = vmul.f32 %v991, %v991
        %v1122 = vmul.f32 %v993, %v993
        %v1123 = vmul.f32 %v997, %v997
        %v1124 = vmul.f32 %v999, %v999
        %v1125 = vmul.f32 %v1003, %v1003
        %v1126 = vmul.f32 %v1005, %v1005
        %v1127 = vmul.f32 %v1009, %v1009
        %v1128 = vmul.f32 %v1011, %v1011
        %v1129 = vmul.f32 %v1015, %v1015
        %v1130 = vmul.f32 %v1017, %v1017
        %v1131 = vadd.f32 %v1019, %v1075
        %v1132 = vadd.f32 %v1020, %v1076
        %v1133 = vadd.f32 %v1021, %v1077
        %v1134 = vadd.f32 %v1022, %v1078
        %v1135 = vadd.f32 %v1023, %v1079
        %v1136 = vadd.f32 %v1024, %v1080
        %v1137 = vadd.f32 %v1025, %v1081
        %v1138 = vadd.f32 %v1026, %v1082
        %v1139 = vadd.f32 %v1027, %v1083
        %v1140 = vadd.f32 %v1028, %v1084
        %v1141 = vadd.f32 %v1029, %v1085
        %v1142 = vadd.f32 %v1030, %v1086
        %v1143 = vadd.f32 %v1031, %v1087
        %v1144 = vadd.f32 %v1032, %v1088
        %v1145 = vadd.f32 %v1033, %v1089
        %v1146 = vadd.f32 %v1034, %v1090
        %v1147 = vadd.f32 %v1035, %v1091
        %v1148 = vadd.f32 %v1036, %v1092
        %v1149 = vadd.f32 %v1037, %v1093
        %v1150 = vadd.f32 %v1038, %v1094
        %v1151 = vadd.f32 %v1039, %v1095
        %v1152 = vadd.f32 %v1040, %v1096
        %v1153 = vadd.f32 %v1041, %v1097
        %v1154 = vadd.f32 %v1042, %v1098
        %v1155 = vadd.f32 %v1043, %v1099
        %v1156 = vadd.f32 %v1044, %v1100
        %v1157 = vadd.f32 %v1045, %v1101
        %v1158 = vadd.f32 %v1046, %v1102
        %v1159 = vadd.f32 %v1047, %v1103
        %v1160 = vadd.f32 %v1048, %v1104
        %v1161 = vadd.f32 %v1049, %v1105
        %v1162 = vadd.f32 %v1050, %v1106
        %v1163 = vadd.f32 %v1051, %v1107
        %v1164 = vadd.f32 %v1052, %v1108
        %v1165 = vadd.f32 %v1053, %v1109
        %v1166 = vadd.f32 %v1054, %v1110
        %v1167 = vadd.f32 %v1055, %v1111
        %v1168 = vadd.f32 %v1056, %v1112
        %v1169 = vadd.f32 %v1057, %v1113
        %v1170 = vadd.f32 %v1058, %v1114
        %v1171 = vadd.f32 %v1059, %v1115
        %v1172 = vadd.f32 %v1060, %v1116
        %v1173 = vadd.f32 %v1061, %v1117
        %v1174 = vadd.f32 %v1062, %v1118
        %v1175 = vadd.f32 %v1063, %v1119
        %v1176 = vadd.f32 %v1064, %v1120
        %v1177 = vadd.f32 %v1065, %v1121
        %v1178 = vadd.f32 %v1066, %v1122
        %v1179 = vadd.f32 %v1067, %v1123
        %v1180 = vadd.f32 %v1068, %v1124
        %v1181 = vadd.f32 %v1069, %v1125
        %v1182 = vadd.f32 %v1070, %v1126
        %v1183 = vadd.f32 %v1071, %v1127
        %v1184 = vadd.f32 %v1072, %v1128
        %v1185 = vadd.f32 %v1073, %v1129
        %v1186 = vadd.f32 %v1074, %v1130
        %v1187 = vrsqrt.pop %v1131
        %v1188 = vmul.f32 %v1131, %v1187
        %vm1189 = vcmp.eq.f32.partialorder %v1131, inf
        %v1190 = vsel %vm1189, %v1131, %v1188
        %vm1191 = vcmp.eq.f32.partialorder %v1131, 0.0
        %v1192 = vand.u32 %v1131, 2147483648
        %v1193 = vsel %vm1191, %v1192, %v1190
        %v1194 = vrsqrt.pop %v1132
        %v1195 = vmul.f32 %v1132, %v1194
        %vm1196 = vcmp.eq.f32.partialorder %v1132, inf
        %v1197 = vsel %vm1196, %v1132, %v1195
        %vm1198 = vcmp.eq.f32.partialorder %v1132, 0.0
        %v1199 = vand.u32 %v1132, 2147483648
        %v1200 = vsel %vm1198, %v1199, %v1197
        %v1201 = vrsqrt.pop %v1133
        %v1202 = vmul.f32 %v1133, %v1201
        %vm1203 = vcmp.eq.f32.partialorder %v1133, inf
        %v1204 = vsel %vm1203, %v1133, %v1202
        %vm1205 = vcmp.eq.f32.partialorder %v1133, 0.0
        %v1206 = vand.u32 %v1133, 2147483648
        %v1207 = vsel %vm1205, %v1206, %v1204
        %v1208 = vrsqrt.pop %v1134
        %v1209 = vmul.f32 %v1134, %v1208
        %vm1210 = vcmp.eq.f32.partialorder %v1134, inf
        %v1211 = vsel %vm1210, %v1134, %v1209
        %vm1212 = vcmp.eq.f32.partialorder %v1134, 0.0
        %v1213 = vand.u32 %v1134, 2147483648
        %v1214 = vsel %vm1212, %v1213, %v1211
        %v1215 = vrsqrt.pop %v1135
        %v1216 = vmul.f32 %v1135, %v1215
        %vm1217 = vcmp.eq.f32.partialorder %v1135, inf
        %v1218 = vsel %vm1217, %v1135, %v1216
        %vm1219 = vcmp.eq.f32.partialorder %v1135, 0.0
        %v1220 = vand.u32 %v1135, 2147483648
        %v1221 = vsel %vm1219, %v1220, %v1218
        %v1222 = vrsqrt.pop %v1136
        %v1223 = vmul.f32 %v1136, %v1222
        %vm1224 = vcmp.eq.f32.partialorder %v1136, inf
        %v1225 = vsel %vm1224, %v1136, %v1223
        %vm1226 = vcmp.eq.f32.partialorder %v1136, 0.0
        %v1227 = vand.u32 %v1136, 2147483648
        %v1228 = vsel %vm1226, %v1227, %v1225
        %v1229 = vrsqrt.pop %v1137
        %v1230 = vmul.f32 %v1137, %v1229
        %vm1231 = vcmp.eq.f32.partialorder %v1137, inf
        %v1232 = vsel %vm1231, %v1137, %v1230
        %vm1233 = vcmp.eq.f32.partialorder %v1137, 0.0
        %v1234 = vand.u32 %v1137, 2147483648
        %v1235 = vsel %vm1233, %v1234, %v1232
        %v1236 = vrsqrt.pop %v1138
        %v1237 = vmul.f32 %v1138, %v1236
        %vm1238 = vcmp.eq.f32.partialorder %v1138, inf
        %v1239 = vsel %vm1238, %v1138, %v1237
        %vm1240 = vcmp.eq.f32.partialorder %v1138, 0.0
        %v1241 = vand.u32 %v1138, 2147483648
        %v1242 = vsel %vm1240, %v1241, %v1239
        %v1243 = vrsqrt.pop %v1139
        %v1244 = vmul.f32 %v1139, %v1243
        %vm1245 = vcmp.eq.f32.partialorder %v1139, inf
        %v1246 = vsel %vm1245, %v1139, %v1244
        %vm1247 = vcmp.eq.f32.partialorder %v1139, 0.0
        %v1248 = vand.u32 %v1139, 2147483648
        %v1249 = vsel %vm1247, %v1248, %v1246
        %v1250 = vrsqrt.pop %v1140
        %v1251 = vmul.f32 %v1140, %v1250
        %vm1252 = vcmp.eq.f32.partialorder %v1140, inf
        %v1253 = vsel %vm1252, %v1140, %v1251
        %vm1254 = vcmp.eq.f32.partialorder %v1140, 0.0
        %v1255 = vand.u32 %v1140, 2147483648
        %v1256 = vsel %vm1254, %v1255, %v1253
        %v1257 = vrsqrt.pop %v1141
        %v1258 = vmul.f32 %v1141, %v1257
        %vm1259 = vcmp.eq.f32.partialorder %v1141, inf
        %v1260 = vsel %vm1259, %v1141, %v1258
        %vm1261 = vcmp.eq.f32.partialorder %v1141, 0.0
        %v1262 = vand.u32 %v1141, 2147483648
        %v1263 = vsel %vm1261, %v1262, %v1260
        %v1264 = vrsqrt.pop %v1142
        %v1265 = vmul.f32 %v1142, %v1264
        %vm1266 = vcmp.eq.f32.partialorder %v1142, inf
        %v1267 = vsel %vm1266, %v1142, %v1265
        %vm1268 = vcmp.eq.f32.partialorder %v1142, 0.0
        %v1269 = vand.u32 %v1142, 2147483648
        %v1270 = vsel %vm1268, %v1269, %v1267
        %v1271 = vrsqrt.pop %v1143
        %v1272 = vmul.f32 %v1143, %v1271
        %vm1273 = vcmp.eq.f32.partialorder %v1143, inf
        %v1274 = vsel %vm1273, %v1143, %v1272
        %vm1275 = vcmp.eq.f32.partialorder %v1143, 0.0
        %v1276 = vand.u32 %v1143, 2147483648
        %v1277 = vsel %vm1275, %v1276, %v1274
        %v1278 = vrsqrt.pop %v1144
        %v1279 = vmul.f32 %v1144, %v1278
        %vm1280 = vcmp.eq.f32.partialorder %v1144, inf
        %v1281 = vsel %vm1280, %v1144, %v1279
        %vm1282 = vcmp.eq.f32.partialorder %v1144, 0.0
        %v1283 = vand.u32 %v1144, 2147483648
        %v1284 = vsel %vm1282, %v1283, %v1281
        %v1285 = vrsqrt.pop %v1145
        %v1286 = vmul.f32 %v1145, %v1285
        %vm1287 = vcmp.eq.f32.partialorder %v1145, inf
        %v1288 = vsel %vm1287, %v1145, %v1286
        %vm1289 = vcmp.eq.f32.partialorder %v1145, 0.0
        %v1290 = vand.u32 %v1145, 2147483648
        %v1291 = vsel %vm1289, %v1290, %v1288
        %v1292 = vrsqrt.pop %v1146
        %v1293 = vmul.f32 %v1146, %v1292
        %vm1294 = vcmp.eq.f32.partialorder %v1146, inf
        %v1295 = vsel %vm1294, %v1146, %v1293
        %vm1296 = vcmp.eq.f32.partialorder %v1146, 0.0
        %v1297 = vand.u32 %v1146, 2147483648
        %v1298 = vsel %vm1296, %v1297, %v1295
        %v1299 = vrsqrt.pop %v1147
        %v1300 = vmul.f32 %v1147, %v1299
        %vm1301 = vcmp.eq.f32.partialorder %v1147, inf
        %v1302 = vsel %vm1301, %v1147, %v1300
        %vm1303 = vcmp.eq.f32.partialorder %v1147, 0.0
        %v1304 = vand.u32 %v1147, 2147483648
        %v1305 = vsel %vm1303, %v1304, %v1302
        %v1306 = vrsqrt.pop %v1148
        %v1307 = vmul.f32 %v1148, %v1306
        %vm1308 = vcmp.eq.f32.partialorder %v1148, inf
        %v1309 = vsel %vm1308, %v1148, %v1307
        %vm1310 = vcmp.eq.f32.partialorder %v1148, 0.0
        %v1311 = vand.u32 %v1148, 2147483648
        %v1312 = vsel %vm1310, %v1311, %v1309
        %v1313 = vrsqrt.pop %v1149
        %v1314 = vmul.f32 %v1149, %v1313
        %vm1315 = vcmp.eq.f32.partialorder %v1149, inf
        %v1316 = vsel %vm1315, %v1149, %v1314
        %vm1317 = vcmp.eq.f32.partialorder %v1149, 0.0
        %v1318 = vand.u32 %v1149, 2147483648
        %v1319 = vsel %vm1317, %v1318, %v1316
        %v1320 = vrsqrt.pop %v1150
        %v1321 = vmul.f32 %v1150, %v1320
        %vm1322 = vcmp.eq.f32.partialorder %v1150, inf
        %v1323 = vsel %vm1322, %v1150, %v1321
        %vm1324 = vcmp.eq.f32.partialorder %v1150, 0.0
        %v1325 = vand.u32 %v1150, 2147483648
        %v1326 = vsel %vm1324, %v1325, %v1323
        %v1327 = vrsqrt.pop %v1151
        %v1328 = vmul.f32 %v1151, %v1327
        %vm1329 = vcmp.eq.f32.partialorder %v1151, inf
        %v1330 = vsel %vm1329, %v1151, %v1328
        %vm1331 = vcmp.eq.f32.partialorder %v1151, 0.0
        %v1332 = vand.u32 %v1151, 2147483648
        %v1333 = vsel %vm1331, %v1332, %v1330
        %v1334 = vrsqrt.pop %v1152
        %v1335 = vmul.f32 %v1152, %v1334
        %vm1336 = vcmp.eq.f32.partialorder %v1152, inf
        %v1337 = vsel %vm1336, %v1152, %v1335
        %vm1338 = vcmp.eq.f32.partialorder %v1152, 0.0
        %v1339 = vand.u32 %v1152, 2147483648
        %v1340 = vsel %vm1338, %v1339, %v1337
        %v1341 = vrsqrt.pop %v1153
        %v1342 = vmul.f32 %v1153, %v1341
        %vm1343 = vcmp.eq.f32.partialorder %v1153, inf
        %v1344 = vsel %vm1343, %v1153, %v1342
        %vm1345 = vcmp.eq.f32.partialorder %v1153, 0.0
        %v1346 = vand.u32 %v1153, 2147483648
        %v1347 = vsel %vm1345, %v1346, %v1344
        %v1348 = vrsqrt.pop %v1154
        %v1349 = vmul.f32 %v1154, %v1348
        %vm1350 = vcmp.eq.f32.partialorder %v1154, inf
        %v1351 = vsel %vm1350, %v1154, %v1349
        %vm1352 = vcmp.eq.f32.partialorder %v1154, 0.0
        %v1353 = vand.u32 %v1154, 2147483648
        %v1354 = vsel %vm1352, %v1353, %v1351
        %v1355 = vrsqrt.pop %v1155
        %v1356 = vmul.f32 %v1155, %v1355
        %vm1357 = vcmp.eq.f32.partialorder %v1155, inf
        %v1358 = vsel %vm1357, %v1155, %v1356
        %vm1359 = vcmp.eq.f32.partialorder %v1155, 0.0
        %v1360 = vand.u32 %v1155, 2147483648
        %v1361 = vsel %vm1359, %v1360, %v1358
        %v1362 = vrsqrt.pop %v1156
        %v1363 = vmul.f32 %v1156, %v1362
        %vm1364 = vcmp.eq.f32.partialorder %v1156, inf
        %v1365 = vsel %vm1364, %v1156, %v1363
        %vm1366 = vcmp.eq.f32.partialorder %v1156, 0.0
        %v1367 = vand.u32 %v1156, 2147483648
        %v1368 = vsel %vm1366, %v1367, %v1365
        %v1369 = vrsqrt.pop %v1157
        %v1370 = vmul.f32 %v1157, %v1369
        %vm1371 = vcmp.eq.f32.partialorder %v1157, inf
        %v1372 = vsel %vm1371, %v1157, %v1370
        %vm1373 = vcmp.eq.f32.partialorder %v1157, 0.0
        %v1374 = vand.u32 %v1157, 2147483648
        %v1375 = vsel %vm1373, %v1374, %v1372
        %v1376 = vrsqrt.pop %v1158
        %v1377 = vmul.f32 %v1158, %v1376
        %vm1378 = vcmp.eq.f32.partialorder %v1158, inf
        %v1379 = vsel %vm1378, %v1158, %v1377
        %vm1380 = vcmp.eq.f32.partialorder %v1158, 0.0
        %v1381 = vand.u32 %v1158, 2147483648
        %v1382 = vsel %vm1380, %v1381, %v1379
        %v1383 = vrsqrt.pop %v1159
        %v1384 = vmul.f32 %v1159, %v1383
        %vm1385 = vcmp.eq.f32.partialorder %v1159, inf
        %v1386 = vsel %vm1385, %v1159, %v1384
        %vm1387 = vcmp.eq.f32.partialorder %v1159, 0.0
        %v1388 = vand.u32 %v1159, 2147483648
        %v1389 = vsel %vm1387, %v1388, %v1386
        %v1390 = vrsqrt.pop %v1160
        %v1391 = vmul.f32 %v1160, %v1390
        %vm1392 = vcmp.eq.f32.partialorder %v1160, inf
        %v1393 = vsel %vm1392, %v1160, %v1391
        %vm1394 = vcmp.eq.f32.partialorder %v1160, 0.0
        %v1395 = vand.u32 %v1160, 2147483648
        %v1396 = vsel %vm1394, %v1395, %v1393
        %v1397 = vrsqrt.pop %v1161
        %v1398 = vmul.f32 %v1161, %v1397
        %vm1399 = vcmp.eq.f32.partialorder %v1161, inf
        %v1400 = vsel %vm1399, %v1161, %v1398
        %vm1401 = vcmp.eq.f32.partialorder %v1161, 0.0
        %v1402 = vand.u32 %v1161, 2147483648
        %v1403 = vsel %vm1401, %v1402, %v1400
        %v1404 = vrsqrt.pop %v1162
        %v1405 = vmul.f32 %v1162, %v1404
        %vm1406 = vcmp.eq.f32.partialorder %v1162, inf
        %v1407 = vsel %vm1406, %v1162, %v1405
        %vm1408 = vcmp.eq.f32.partialorder %v1162, 0.0
        %v1409 = vand.u32 %v1162, 2147483648
        %v1410 = vsel %vm1408, %v1409, %v1407
        %v1411 = vrsqrt.pop %v1163
        %v1412 = vmul.f32 %v1163, %v1411
        %vm1413 = vcmp.eq.f32.partialorder %v1163, inf
        %v1414 = vsel %vm1413, %v1163, %v1412
        %vm1415 = vcmp.eq.f32.partialorder %v1163, 0.0
        %v1416 = vand.u32 %v1163, 2147483648
        %v1417 = vsel %vm1415, %v1416, %v1414
        %v1418 = vrsqrt.pop %v1164
        %v1419 = vmul.f32 %v1164, %v1418
        %vm1420 = vcmp.eq.f32.partialorder %v1164, inf
        %v1421 = vsel %vm1420, %v1164, %v1419
        %vm1422 = vcmp.eq.f32.partialorder %v1164, 0.0
        %v1423 = vand.u32 %v1164, 2147483648
        %v1424 = vsel %vm1422, %v1423, %v1421
        %v1425 = vrsqrt.pop %v1165
        %v1426 = vmul.f32 %v1165, %v1425
        %vm1427 = vcmp.eq.f32.partialorder %v1165, inf
        %v1428 = vsel %vm1427, %v1165, %v1426
        %vm1429 = vcmp.eq.f32.partialorder %v1165, 0.0
        %v1430 = vand.u32 %v1165, 2147483648
        %v1431 = vsel %vm1429, %v1430, %v1428
        %v1432 = vrsqrt.pop %v1166
        %v1433 = vmul.f32 %v1166, %v1432
        %vm1434 = vcmp.eq.f32.partialorder %v1166, inf
        %v1435 = vsel %vm1434, %v1166, %v1433
        %vm1436 = vcmp.eq.f32.partialorder %v1166, 0.0
        %v1437 = vand.u32 %v1166, 2147483648
        %v1438 = vsel %vm1436, %v1437, %v1435
        %v1439 = vrsqrt.pop %v1167
        %v1440 = vmul.f32 %v1167, %v1439
        %vm1441 = vcmp.eq.f32.partialorder %v1167, inf
        %v1442 = vsel %vm1441, %v1167, %v1440
        %vm1443 = vcmp.eq.f32.partialorder %v1167, 0.0
        %v1444 = vand.u32 %v1167, 2147483648
        %v1445 = vsel %vm1443, %v1444, %v1442
        %v1446 = vrsqrt.pop %v1168
        %v1447 = vmul.f32 %v1168, %v1446
        %vm1448 = vcmp.eq.f32.partialorder %v1168, inf
        %v1449 = vsel %vm1448, %v1168, %v1447
        %vm1450 = vcmp.eq.f32.partialorder %v1168, 0.0
        %v1451 = vand.u32 %v1168, 2147483648
        %v1452 = vsel %vm1450, %v1451, %v1449
        %v1453 = vrsqrt.pop %v1169
        %v1454 = vmul.f32 %v1169, %v1453
        %vm1455 = vcmp.eq.f32.partialorder %v1169, inf
        %v1456 = vsel %vm1455, %v1169, %v1454
        %vm1457 = vcmp.eq.f32.partialorder %v1169, 0.0
        %v1458 = vand.u32 %v1169, 2147483648
        %v1459 = vsel %vm1457, %v1458, %v1456
        %v1460 = vrsqrt.pop %v1170
        %v1461 = vmul.f32 %v1170, %v1460
        %vm1462 = vcmp.eq.f32.partialorder %v1170, inf
        %v1463 = vsel %vm1462, %v1170, %v1461
        %vm1464 = vcmp.eq.f32.partialorder %v1170, 0.0
        %v1465 = vand.u32 %v1170, 2147483648
        %v1466 = vsel %vm1464, %v1465, %v1463
        %v1467 = vrsqrt.pop %v1171
        %v1468 = vmul.f32 %v1171, %v1467
        %vm1469 = vcmp.eq.f32.partialorder %v1171, inf
        %v1470 = vsel %vm1469, %v1171, %v1468
        %vm1471 = vcmp.eq.f32.partialorder %v1171, 0.0
        %v1472 = vand.u32 %v1171, 2147483648
        %v1473 = vsel %vm1471, %v1472, %v1470
        %v1474 = vrsqrt.pop %v1172
        %v1475 = vmul.f32 %v1172, %v1474
        %vm1476 = vcmp.eq.f32.partialorder %v1172, inf
        %v1477 = vsel %vm1476, %v1172, %v1475
        %vm1478 = vcmp.eq.f32.partialorder %v1172, 0.0
        %v1479 = vand.u32 %v1172, 2147483648
        %v1480 = vsel %vm1478, %v1479, %v1477
        %v1481 = vrsqrt.pop %v1173
        %v1482 = vmul.f32 %v1173, %v1481
        %vm1483 = vcmp.eq.f32.partialorder %v1173, inf
        %v1484 = vsel %vm1483, %v1173, %v1482
        %vm1485 = vcmp.eq.f32.partialorder %v1173, 0.0
        %v1486 = vand.u32 %v1173, 2147483648
        %v1487 = vsel %vm1485, %v1486, %v1484
        %v1488 = vrsqrt.pop %v1174
        %v1489 = vmul.f32 %v1174, %v1488
        %vm1490 = vcmp.eq.f32.partialorder %v1174, inf
        %v1491 = vsel %vm1490, %v1174, %v1489
        %vm1492 = vcmp.eq.f32.partialorder %v1174, 0.0
        %v1493 = vand.u32 %v1174, 2147483648
        %v1494 = vsel %vm1492, %v1493, %v1491
        %v1495 = vrsqrt.pop %v1175
        %v1496 = vmul.f32 %v1175, %v1495
        %vm1497 = vcmp.eq.f32.partialorder %v1175, inf
        %v1498 = vsel %vm1497, %v1175, %v1496
        %vm1499 = vcmp.eq.f32.partialorder %v1175, 0.0
        %v1500 = vand.u32 %v1175, 2147483648
        %v1501 = vsel %vm1499, %v1500, %v1498
        %v1502 = vrsqrt.pop %v1176
        %v1503 = vmul.f32 %v1176, %v1502
        %vm1504 = vcmp.eq.f32.partialorder %v1176, inf
        %v1505 = vsel %vm1504, %v1176, %v1503
        %vm1506 = vcmp.eq.f32.partialorder %v1176, 0.0
        %v1507 = vand.u32 %v1176, 2147483648
        %v1508 = vsel %vm1506, %v1507, %v1505
        %v1509 = vrsqrt.pop %v1177
        %v1510 = vmul.f32 %v1177, %v1509
        %vm1511 = vcmp.eq.f32.partialorder %v1177, inf
        %v1512 = vsel %vm1511, %v1177, %v1510
        %vm1513 = vcmp.eq.f32.partialorder %v1177, 0.0
        %v1514 = vand.u32 %v1177, 2147483648
        %v1515 = vsel %vm1513, %v1514, %v1512
        %v1516 = vrsqrt.pop %v1178
        %v1517 = vmul.f32 %v1178, %v1516
        %vm1518 = vcmp.eq.f32.partialorder %v1178, inf
        %v1519 = vsel %vm1518, %v1178, %v1517
        %vm1520 = vcmp.eq.f32.partialorder %v1178, 0.0
        %v1521 = vand.u32 %v1178, 2147483648
        %v1522 = vsel %vm1520, %v1521, %v1519
        %v1523 = vrsqrt.pop %v1179
        %v1524 = vmul.f32 %v1179, %v1523
        %vm1525 = vcmp.eq.f32.partialorder %v1179, inf
        %v1526 = vsel %vm1525, %v1179, %v1524
        %vm1527 = vcmp.eq.f32.partialorder %v1179, 0.0
        %v1528 = vand.u32 %v1179, 2147483648
        %v1529 = vsel %vm1527, %v1528, %v1526
        %v1530 = vrsqrt.pop %v1180
        %v1531 = vmul.f32 %v1180, %v1530
        %vm1532 = vcmp.eq.f32.partialorder %v1180, inf
        %v1533 = vsel %vm1532, %v1180, %v1531
        %vm1534 = vcmp.eq.f32.partialorder %v1180, 0.0
        %v1535 = vand.u32 %v1180, 2147483648
        %v1536 = vsel %vm1534, %v1535, %v1533
        %v1537 = vrsqrt.pop %v1181
        %v1538 = vmul.f32 %v1181, %v1537
        %vm1539 = vcmp.eq.f32.partialorder %v1181, inf
        %v1540 = vsel %vm1539, %v1181, %v1538
        %vm1541 = vcmp.eq.f32.partialorder %v1181, 0.0
        %v1542 = vand.u32 %v1181, 2147483648
        %v1543 = vsel %vm1541, %v1542, %v1540
        %v1544 = vrsqrt.pop %v1182
        %v1545 = vmul.f32 %v1182, %v1544
        %vm1546 = vcmp.eq.f32.partialorder %v1182, inf
        %v1547 = vsel %vm1546, %v1182, %v1545
        %vm1548 = vcmp.eq.f32.partialorder %v1182, 0.0
        %v1549 = vand.u32 %v1182, 2147483648
        %v1550 = vsel %vm1548, %v1549, %v1547
        %v1551 = vrsqrt.pop %v1183
        %v1552 = vmul.f32 %v1183, %v1551
        %vm1553 = vcmp.eq.f32.partialorder %v1183, inf
        %v1554 = vsel %vm1553, %v1183, %v1552
        %vm1555 = vcmp.eq.f32.partialorder %v1183, 0.0
        %v1556 = vand.u32 %v1183, 2147483648
        %v1557 = vsel %vm1555, %v1556, %v1554
        %v1558 = vrsqrt.pop %v1184
        %v1559 = vmul.f32 %v1184, %v1558
        %vm1560 = vcmp.eq.f32.partialorder %v1184, inf
        %v1561 = vsel %vm1560, %v1184, %v1559
        %vm1562 = vcmp.eq.f32.partialorder %v1184, 0.0
        %v1563 = vand.u32 %v1184, 2147483648
        %v1564 = vsel %vm1562, %v1563, %v1561
        %v1565 = vrsqrt.pop %v1185
        %v1566 = vmul.f32 %v1185, %v1565
        %vm1567 = vcmp.eq.f32.partialorder %v1185, inf
        %v1568 = vsel %vm1567, %v1185, %v1566
        %vm1569 = vcmp.eq.f32.partialorder %v1185, 0.0
        %v1570 = vand.u32 %v1185, 2147483648
        %v1571 = vsel %vm1569, %v1570, %v1568
        %v1572 = vrsqrt.pop %v1186
        %v1573 = vmul.f32 %v1186, %v1572
        %vm1574 = vcmp.eq.f32.partialorder %v1186, inf
        %v1575 = vsel %vm1574, %v1186, %v1573
        %vm1576 = vcmp.eq.f32.partialorder %v1186, 0.0
        %v1577 = vand.u32 %v1186, 2147483648
        %v1578 = vsel %vm1576, %v1577, %v1575
        %vm1579 = vcmask 785408
        %v1580 = vsel %vm1579, %v510, 0.0
        %v1581 = vadd.f32 %v508, %v1580
        %v1582 = vadd.f32 %v1581, %v514
        %v1583 = vsel %vm1579, %v516, 0.0
        %v1584 = vadd.f32 %v1582, %v1583
        %v1585 = vadd.f32 %v1584, %v520
        %v1586 = vsel %vm1579, %v522, 0.0
        %v1587 = vadd.f32 %v1585, %v1586
        %v1588 = vadd.f32 %v1587, %v526
        %v1589 = vsel %vm1579, %v528, 0.0
        %v1590 = vadd.f32 %v1588, %v1589
        %v1591 = vadd.f32 %v1590, %v532
        %v1592 = vsel %vm1579, %v534, 0.0
        %v1593 = vadd.f32 %v1591, %v1592
        %v1594 = vadd.f32 %v1593, %v538
        %v1595 = vsel %vm1579, %v540, 0.0
        %v1596 = vadd.f32 %v1594, %v1595
        %v1597 = vadd.f32 %v1596, %v544
        %v1598 = vsel %vm1579, %v546, 0.0
        %v1599 = vadd.f32 %v1597, %v1598
        %v1600 = vadd.f32 %v1599, %v550
        %v1601 = vsel %vm1579, %v552, 0.0
        %v1602 = vadd.f32 %v1600, %v1601
        %v1603 = vadd.f32 %v1602, %v556
        %v1604 = vsel %vm1579, %v558, 0.0
        %v1605 = vadd.f32 %v1603, %v1604
        %v1606 = vadd.f32 %v1605, %v562
        %v1607 = vsel %vm1579, %v564, 0.0
        %v1608 = vadd.f32 %v1606, %v1607
        %v1609 = vadd.f32 %v1608, %v568
        %v1610 = vsel %vm1579, %v570, 0.0
        %v1611 = vadd.f32 %v1609, %v1610
        %v1612 = vadd.f32 %v1611, %v574
        %v1613 = vsel %vm1579, %v576, 0.0
        %v1614 = vadd.f32 %v1612, %v1613
        %v1615 = vadd.f32 %v1614, %v580
        %v1616 = vsel %vm1579, %v582, 0.0
        %v1617 = vadd.f32 %v1615, %v1616
        %v1618 = vadd.f32 %v1617, %v586
        %v1619 = vsel %vm1579, %v588, 0.0
        %v1620 = vadd.f32 %v1618, %v1619
        %v1621 = vadd.f32 %v1620, %v592
        %v1622 = vsel %vm1579, %v594, 0.0
        %v1623 = vadd.f32 %v1621, %v1622
        %v1624 = vadd.f32 %v1623, %v598
        %v1625 = vsel %vm1579, %v600, 0.0
        %v1626 = vadd.f32 %v1624, %v1625
        %v1627 = vadd.f32 %v1626, %v604
        %v1628 = vsel %vm1579, %v606, 0.0
        %v1629 = vadd.f32 %v1627, %v1628
        %v1630 = vadd.f32 %v1629, %v610
        %v1631 = vsel %vm1579, %v612, 0.0
        %v1632 = vadd.f32 %v1630, %v1631
        %v1633 = vadd.f32 %v1632, %v616
        %v1634 = vsel %vm1579, %v618, 0.0
        %v1635 = vadd.f32 %v1633, %v1634
        %v1636 = vadd.f32 %v1635, %v622
        %v1637 = vsel %vm1579, %v624, 0.0
        %v1638 = vadd.f32 %v1636, %v1637
        %v1639 = vadd.f32 %v1638, %v628
        %v1640 = vsel %vm1579, %v630, 0.0
        %v1641 = vadd.f32 %v1639, %v1640
        %v1642 = vadd.f32 %v1641, %v634
        %v1643 = vsel %vm1579, %v636, 0.0
        %v1644 = vadd.f32 %v1642, %v1643
        %v1645 = vadd.f32 %v1644, %v640
        %v1646 = vsel %vm1579, %v642, 0.0
        %v1647 = vadd.f32 %v1645, %v1646
        %v1648 = vadd.f32 %v1647, %v646
        %v1649 = vsel %vm1579, %v648, 0.0
        %v1650 = vadd.f32 %v1648, %v1649
        %v1651 = vadd.f32 %v1650, %v652
        %v1652 = vsel %vm1579, %v654, 0.0
        %v1653 = vadd.f32 %v1651, %v1652
        %v1654 = vadd.f32 %v1653, %v658
        %v1655 = vsel %vm1579, %v660, 0.0
        %v1656 = vadd.f32 %v1654, %v1655
        %v1657 = vadd.f32 %v1656, %v664
        %v1658 = vsel %vm1579, %v666, 0.0
        %v1659 = vadd.f32 %v1657, %v1658
        %v1660 = vadd.f32 %v1659, %v670
        %v1661 = vsel %vm1579, %v672, 0.0
        %v1662 = vadd.f32 %v1660, %v1661
        %1663 = vadd.xlane.f32.xlu0 %v1662
        %v1664 = vpop.xlane.xlu0 %1663
        %v1665 = vrot.slane %v1664, 4
        %v1666 = vadd.f32 %v1664, %v1665
        %v1667 = vrot.slane %v1666, 2
        %v1668 = vadd.f32 %v1666, %v1667
        %v1669 = vrot.slane %v1668, 1
        %v1670 = vadd.f32 %v1668, %v1669
        %s1671 = vtos %v1670
        %v1672 = vsel %vm1579, %v1020, 0.0
        %v1673 = vadd.f32 %v1019, %v1672
        %v1674 = vadd.f32 %v1673, %v1021
        %v1675 = vsel %vm1579, %v1022, 0.0
        %v1676 = vadd.f32 %v1674, %v1675
        %v1677 = vadd.f32 %v1676, %v1023
        %v1678 = vsel %vm1579, %v1024, 0.0
        %v1679 = vadd.f32 %v1677, %v1678
        %v1680 = vadd.f32 %v1679, %v1025
        %v1681 = vsel %vm1579, %v1026, 0.0
        %v1682 = vadd.f32 %v1680, %v1681
        %v1683 = vadd.f32 %v1682, %v1027
        %v1684 = vsel %vm1579, %v1028, 0.0
        %v1685 = vadd.f32 %v1683, %v1684
        %v1686 = vadd.f32 %v1685, %v1029
        %v1687 = vsel %vm1579, %v1030, 0.0
        %v1688 = vadd.f32 %v1686, %v1687
        %v1689 = vadd.f32 %v1688, %v1031
        %v1690 = vsel %vm1579, %v1032, 0.0
        %v1691 = vadd.f32 %v1689, %v1690
        %v1692 = vadd.f32 %v1691, %v1033
        %v1693 = vsel %vm1579, %v1034, 0.0
        %v1694 = vadd.f32 %v1692, %v1693
        %v1695 = vadd.f32 %v1694, %v1035
        %v1696 = vsel %vm1579, %v1036, 0.0
        %v1697 = vadd.f32 %v1695, %v1696
        %v1698 = vadd.f32 %v1697, %v1037
        %v1699 = vsel %vm1579, %v1038, 0.0
        %v1700 = vadd.f32 %v1698, %v1699
        %v1701 = vadd.f32 %v1700, %v1039
        %v1702 = vsel %vm1579, %v1040, 0.0
        %v1703 = vadd.f32 %v1701, %v1702
        %v1704 = vadd.f32 %v1703, %v1041
        %v1705 = vsel %vm1579, %v1042, 0.0
        %v1706 = vadd.f32 %v1704, %v1705
        %v1707 = vadd.f32 %v1706, %v1043
        %v1708 = vsel %vm1579, %v1044, 0.0
        %v1709 = vadd.f32 %v1707, %v1708
        %v1710 = vadd.f32 %v1709, %v1045
        %v1711 = vsel %vm1579, %v1046, 0.0
        %v1712 = vadd.f32 %v1710, %v1711
        %v1713 = vadd.f32 %v1712, %v1047
        %v1714 = vsel %vm1579, %v1048, 0.0
        %v1715 = vadd.f32 %v1713, %v1714
        %v1716 = vadd.f32 %v1715, %v1049
        %v1717 = vsel %vm1579, %v1050, 0.0
        %v1718 = vadd.f32 %v1716, %v1717
        %v1719 = vadd.f32 %v1718, %v1051
        %v1720 = vsel %vm1579, %v1052, 0.0
        %v1721 = vadd.f32 %v1719, %v1720
        %v1722 = vadd.f32 %v1721, %v1053
        %v1723 = vsel %vm1579, %v1054, 0.0
        %v1724 = vadd.f32 %v1722, %v1723
        %v1725 = vadd.f32 %v1724, %v1055
        %v1726 = vsel %vm1579, %v1056, 0.0
        %v1727 = vadd.f32 %v1725, %v1726
        %v1728 = vadd.f32 %v1727, %v1057
        %v1729 = vsel %vm1579, %v1058, 0.0
        %v1730 = vadd.f32 %v1728, %v1729
        %v1731 = vadd.f32 %v1730, %v1059
        %v1732 = vsel %vm1579, %v1060, 0.0
        %v1733 = vadd.f32 %v1731, %v1732
        %v1734 = vadd.f32 %v1733, %v1061
        %v1735 = vsel %vm1579, %v1062, 0.0
        %v1736 = vadd.f32 %v1734, %v1735
        %v1737 = vadd.f32 %v1736, %v1063
        %v1738 = vsel %vm1579, %v1064, 0.0
        %v1739 = vadd.f32 %v1737, %v1738
        %v1740 = vadd.f32 %v1739, %v1065
        %v1741 = vsel %vm1579, %v1066, 0.0
        %v1742 = vadd.f32 %v1740, %v1741
        %v1743 = vadd.f32 %v1742, %v1067
        %v1744 = vsel %vm1579, %v1068, 0.0
        %v1745 = vadd.f32 %v1743, %v1744
        %v1746 = vadd.f32 %v1745, %v1069
        %v1747 = vsel %vm1579, %v1070, 0.0
        %v1748 = vadd.f32 %v1746, %v1747
        %v1749 = vadd.f32 %v1748, %v1071
        %v1750 = vsel %vm1579, %v1072, 0.0
        %v1751 = vadd.f32 %v1749, %v1750
        %v1752 = vadd.f32 %v1751, %v1073
        %v1753 = vsel %vm1579, %v1074, 0.0
        %v1754 = vadd.f32 %v1752, %v1753
        %1755 = vadd.xlane.f32.xlu0 %v1754
        %v1756 = vpop.xlane.xlu0 %1755
        %v1757 = vrot.slane %v1756, 4
        %v1758 = vadd.f32 %v1756, %v1757
        %v1759 = vrot.slane %v1758, 2
        %v1760 = vadd.f32 %v1758, %v1759
        %v1761 = vrot.slane %v1760, 1
        %v1762 = vadd.f32 %v1760, %v1761
        %s1763 = vtos %v1762
        %v1764 = vrcp.pop 50176.0
        %s1765 = vtos %v1764
        %s1766 = smul.f32 %s1671, %s1765
        %s1767 = smul.f32 %s1671, %s1766
        %s1768 = ssub.f32 %s1763, %s1767
        %v1769 = vrcp.pop 50175.0
        %s1770 = vtos %v1769
        %s1771 = smul.f32 %s1768, %s1770
        %v1772 = vstv %s1766
        %v1773 = vsub.f32 %v508, %v1772
        %v1774 = vsub.f32 %v510, %v1772
        %v1775 = vsub.f32 %v514, %v1772
        %v1776 = vsub.f32 %v516, %v1772
        %v1777 = vsub.f32 %v520, %v1772
        %v1778 = vsub.f32 %v522, %v1772
        %v1779 = vsub.f32 %v526, %v1772
        %v1780 = vsub.f32 %v528, %v1772
        %v1781 = vsub.f32 %v532, %v1772
        %v1782 = vsub.f32 %v534, %v1772
        %v1783 = vsub.f32 %v538, %v1772
        %v1784 = vsub.f32 %v540, %v1772
        %v1785 = vsub.f32 %v544, %v1772
        %v1786 = vsub.f32 %v546, %v1772
        %v1787 = vsub.f32 %v550, %v1772
        %v1788 = vsub.f32 %v552, %v1772
        %v1789 = vsub.f32 %v556, %v1772
        %v1790 = vsub.f32 %v558, %v1772
        %v1791 = vsub.f32 %v562, %v1772
        %v1792 = vsub.f32 %v564, %v1772
        %v1793 = vsub.f32 %v568, %v1772
        %v1794 = vsub.f32 %v570, %v1772
        %v1795 = vsub.f32 %v574, %v1772
        %v1796 = vsub.f32 %v576, %v1772
        %v1797 = vsub.f32 %v580, %v1772
        %v1798 = vsub.f32 %v582, %v1772
        %v1799 = vsub.f32 %v586, %v1772
        %v1800 = vsub.f32 %v588, %v1772
        %v1801 = vsub.f32 %v592, %v1772
        %v1802 = vsub.f32 %v594, %v1772
        %v1803 = vsub.f32 %v598, %v1772
        %v1804 = vsub.f32 %v600, %v1772
        %v1805 = vsub.f32 %v604, %v1772
        %v1806 = vsub.f32 %v606, %v1772
        %v1807 = vsub.f32 %v610, %v1772
        %v1808 = vsub.f32 %v612, %v1772
        %v1809 = vsub.f32 %v616, %v1772
        %v1810 = vsub.f32 %v618, %v1772
        %v1811 = vsub.f32 %v622, %v1772
        %v1812 = vsub.f32 %v624, %v1772
        %v1813 = vsub.f32 %v628, %v1772
        %v1814 = vsub.f32 %v630, %v1772
        %v1815 = vsub.f32 %v634, %v1772
        %v1816 = vsub.f32 %v636, %v1772
        %v1817 = vsub.f32 %v640, %v1772
        %v1818 = vsub.f32 %v642, %v1772
        %v1819 = vsub.f32 %v646, %v1772
        %v1820 = vsub.f32 %v648, %v1772
        %v1821 = vsub.f32 %v652, %v1772
        %v1822 = vsub.f32 %v654, %v1772
        %v1823 = vsub.f32 %v658, %v1772
        %v1824 = vsub.f32 %v660, %v1772
        %v1825 = vsub.f32 %v664, %v1772
        %v1826 = vsub.f32 %v666, %v1772
        %v1827 = vsub.f32 %v670, %v1772
        %v1828 = vsub.f32 %v672, %v1772
        %v1829 = vstv %s1771
        %v1830 = vrsqrt.pop %v1829
        %s1831 = vtos %v1830
        %v1832 = vstv %s1831
        %v1833 = vmul.f32 %v1773, %v1832
        %v1834 = vmul.f32 %v1774, %v1832
        %v1835 = vmul.f32 %v1775, %v1832
        %v1836 = vmul.f32 %v1776, %v1832
        %v1837 = vmul.f32 %v1777, %v1832
        %v1838 = vmul.f32 %v1778, %v1832
        %v1839 = vmul.f32 %v1779, %v1832
        %v1840 = vmul.f32 %v1780, %v1832
        %v1841 = vmul.f32 %v1781, %v1832
        %v1842 = vmul.f32 %v1782, %v1832
        %v1843 = vmul.f32 %v1783, %v1832
        %v1844 = vmul.f32 %v1784, %v1832
        %v1845 = vmul.f32 %v1785, %v1832
        %v1846 = vmul.f32 %v1786, %v1832
        %v1847 = vmul.f32 %v1787, %v1832
        %v1848 = vmul.f32 %v1788, %v1832
        %v1849 = vmul.f32 %v1789, %v1832
        %v1850 = vmul.f32 %v1790, %v1832
        %v1851 = vmul.f32 %v1791, %v1832
        %v1852 = vmul.f32 %v1792, %v1832
        %v1853 = vmul.f32 %v1793, %v1832
        %v1854 = vmul.f32 %v1794, %v1832
        %v1855 = vmul.f32 %v1795, %v1832
        %v1856 = vmul.f32 %v1796, %v1832
        %v1857 = vmul.f32 %v1797, %v1832
        %v1858 = vmul.f32 %v1798, %v1832
        %v1859 = vmul.f32 %v1799, %v1832
        %v1860 = vmul.f32 %v1800, %v1832
        %v1861 = vmul.f32 %v1801, %v1832
        %v1862 = vmul.f32 %v1802, %v1832
        %v1863 = vmul.f32 %v1803, %v1832
        %v1864 = vmul.f32 %v1804, %v1832
        %v1865 = vmul.f32 %v1805, %v1832
        %v1866 = vmul.f32 %v1806, %v1832
        %v1867 = vmul.f32 %v1807, %v1832
        %v1868 = vmul.f32 %v1808, %v1832
        %v1869 = vmul.f32 %v1809, %v1832
        %v1870 = vmul.f32 %v1810, %v1832
        %v1871 = vmul.f32 %v1811, %v1832
        %v1872 = vmul.f32 %v1812, %v1832
        %v1873 = vmul.f32 %v1813, %v1832
        %v1874 = vmul.f32 %v1814, %v1832
        %v1875 = vmul.f32 %v1815, %v1832
        %v1876 = vmul.f32 %v1816, %v1832
        %v1877 = vmul.f32 %v1817, %v1832
        %v1878 = vmul.f32 %v1818, %v1832
        %v1879 = vmul.f32 %v1819, %v1832
        %v1880 = vmul.f32 %v1820, %v1832
        %v1881 = vmul.f32 %v1821, %v1832
        %v1882 = vmul.f32 %v1822, %v1832
        %v1883 = vmul.f32 %v1823, %v1832
        %v1884 = vmul.f32 %v1824, %v1832
        %v1885 = vmul.f32 %v1825, %v1832
        %v1886 = vmul.f32 %v1826, %v1832
        %v1887 = vmul.f32 %v1827, %v1832
        %v1888 = vmul.f32 %v1828, %v1832
        %1889 = vst [vmem:[%s205] sm:$0xff] %v1833
        %1890 = vst.msk [vmem:[%s205 + $0x8] sm:$0xff] %vm1579, %v1834
        %1891 = vst [vmem:[%s205 + $0x10] sm:$0xff] %v1835
        %1892 = vst.msk [vmem:[%s205 + $0x18] sm:$0xff] %vm1579, %v1836
        %1893 = vst [vmem:[%s205 + $0x20] sm:$0xff] %v1837
        %1894 = vst.msk [vmem:[%s205 + $0x28] sm:$0xff] %vm1579, %v1838
        %1895 = vst [vmem:[%s205 + $0x30] sm:$0xff] %v1839
        %1896 = vst.msk [vmem:[%s205 + $0x38] sm:$0xff] %vm1579, %v1840
        %1897 = vst [vmem:[%s205 + $0x40] sm:$0xff] %v1841
        %1898 = vst.msk [vmem:[%s205 + $0x48] sm:$0xff] %vm1579, %v1842
        %1899 = vst [vmem:[%s205 + $0x50] sm:$0xff] %v1843
        %1900 = vst.msk [vmem:[%s205 + $0x58] sm:$0xff] %vm1579, %v1844
        %1901 = vst [vmem:[%s205 + $0x60] sm:$0xff] %v1845
        %1902 = vst.msk [vmem:[%s205 + $0x68] sm:$0xff] %vm1579, %v1846
        %1903 = vst [vmem:[%s205 + $0x70] sm:$0xff] %v1847
        %1904 = vst.msk [vmem:[%s205 + $0x78] sm:$0xff] %vm1579, %v1848
        %1905 = vst [vmem:[%s205 + $0x80] sm:$0xff] %v1849
        %1906 = vst.msk [vmem:[%s205 + $0x88] sm:$0xff] %vm1579, %v1850
        %1907 = vst [vmem:[%s205 + $0x90] sm:$0xff] %v1851
        %1908 = vst.msk [vmem:[%s205 + $0x98] sm:$0xff] %vm1579, %v1852
        %1909 = vst [vmem:[%s205 + $0xa0] sm:$0xff] %v1853
        %1910 = vst.msk [vmem:[%s205 + $0xa8] sm:$0xff] %vm1579, %v1854
        %1911 = vst [vmem:[%s205 + $0xb0] sm:$0xff] %v1855
        %1912 = vst.msk [vmem:[%s205 + $0xb8] sm:$0xff] %vm1579, %v1856
        %1913 = vst [vmem:[%s205 + $0xc0] sm:$0xff] %v1857
        %1914 = vst.msk [vmem:[%s205 + $0xc8] sm:$0xff] %vm1579, %v1858
        %1915 = vst [vmem:[%s205 + $0xd0] sm:$0xff] %v1859
        %1916 = vst.msk [vmem:[%s205 + $0xd8] sm:$0xff] %vm1579, %v1860
        %1917 = vst [vmem:[%s205 + $0xe0] sm:$0xff] %v1861
        %1918 = vst.msk [vmem:[%s205 + $0xe8] sm:$0xff] %vm1579, %v1862
        %1919 = vst [vmem:[%s205 + $0xf0] sm:$0xff] %v1863
        %1920 = vst.msk [vmem:[%s205 + $0xf8] sm:$0xff] %vm1579, %v1864
        %1921 = vst [vmem:[%s205 + $0x100] sm:$0xff] %v1865
        %1922 = vst.msk [vmem:[%s205 + $0x108] sm:$0xff] %vm1579, %v1866
        %1923 = vst [vmem:[%s205 + $0x110] sm:$0xff] %v1867
        %1924 = vst.msk [vmem:[%s205 + $0x118] sm:$0xff] %vm1579, %v1868
        %1925 = vst [vmem:[%s205 + $0x120] sm:$0xff] %v1869
        %1926 = vst.msk [vmem:[%s205 + $0x128] sm:$0xff] %vm1579, %v1870
        %1927 = vst [vmem:[%s205 + $0x130] sm:$0xff] %v1871
        %1928 = vst.msk [vmem:[%s205 + $0x138] sm:$0xff] %vm1579, %v1872
        %1929 = vst [vmem:[%s205 + $0x140] sm:$0xff] %v1873
        %1930 = vst.msk [vmem:[%s205 + $0x148] sm:$0xff] %vm1579, %v1874
        %1931 = vst [vmem:[%s205 + $0x150] sm:$0xff] %v1875
        %1932 = vst.msk [vmem:[%s205 + $0x158] sm:$0xff] %vm1579, %v1876
        %1933 = vst [vmem:[%s205 + $0x160] sm:$0xff] %v1877
        %1934 = vst.msk [vmem:[%s205 + $0x168] sm:$0xff] %vm1579, %v1878
        %1935 = vst [vmem:[%s205 + $0x170] sm:$0xff] %v1879
        %1936 = vst.msk [vmem:[%s205 + $0x178] sm:$0xff] %vm1579, %v1880
        %1937 = vst [vmem:[%s205 + $0x180] sm:$0xff] %v1881
        %1938 = vst.msk [vmem:[%s205 + $0x188] sm:$0xff] %vm1579, %v1882
        %1939 = vst [vmem:[%s205 + $0x190] sm:$0xff] %v1883
        %1940 = vst.msk [vmem:[%s205 + $0x198] sm:$0xff] %vm1579, %v1884
        %1941 = vst [vmem:[%s205 + $0x1a0] sm:$0xff] %v1885
        %1942 = vst.msk [vmem:[%s205 + $0x1a8] sm:$0xff] %vm1579, %v1886
        %1943 = vst [vmem:[%s205 + $0x1b0] sm:$0xff] %v1887
        %1944 = vst.msk [vmem:[%s205 + $0x1b8] sm:$0xff] %vm1579, %v1888
        %v1945 = vsel %vm1579, %v855, 0.0
        %v1946 = vadd.f32 %v853, %v1945
        %v1947 = vadd.f32 %v1946, %v859
        %v1948 = vsel %vm1579, %v861, 0.0
        %v1949 = vadd.f32 %v1947, %v1948
        %v1950 = vadd.f32 %v1949, %v865
        %v1951 = vsel %vm1579, %v867, 0.0
        %v1952 = vadd.f32 %v1950, %v1951
        %v1953 = vadd.f32 %v1952, %v871
        %v1954 = vsel %vm1579, %v873, 0.0
        %v1955 = vadd.f32 %v1953, %v1954
        %v1956 = vadd.f32 %v1955, %v877
        %v1957 = vsel %vm1579, %v879, 0.0
        %v1958 = vadd.f32 %v1956, %v1957
        %v1959 = vadd.f32 %v1958, %v883
        %v1960 = vsel %vm1579, %v885, 0.0
        %v1961 = vadd.f32 %v1959, %v1960
        %v1962 = vadd.f32 %v1961, %v889
        %v1963 = vsel %vm1579, %v891, 0.0
        %v1964 = vadd.f32 %v1962, %v1963
        %v1965 = vadd.f32 %v1964, %v895
        %v1966 = vsel %vm1579, %v897, 0.0
        %v1967 = vadd.f32 %v1965, %v1966
        %v1968 = vadd.f32 %v1967, %v901
        %v1969 = vsel %vm1579, %v903, 0.0
        %v1970 = vadd.f32 %v1968, %v1969
        %v1971 = vadd.f32 %v1970, %v907
        %v1972 = vsel %vm1579, %v909, 0.0
        %v1973 = vadd.f32 %v1971, %v1972
        %v1974 = vadd.f32 %v1973, %v913
        %v1975 = vsel %vm1579, %v915, 0.0
        %v1976 = vadd.f32 %v1974, %v1975
        %v1977 = vadd.f32 %v1976, %v919
        %v1978 = vsel %vm1579, %v921, 0.0
        %v1979 = vadd.f32 %v1977, %v1978
        %v1980 = vadd.f32 %v1979, %v925
        %v1981 = vsel %vm1579, %v927, 0.0
        %v1982 = vadd.f32 %v1980, %v1981
        %v1983 = vadd.f32 %v1982, %v931
        %v1984 = vsel %vm1579, %v933, 0.0
        %v1985 = vadd.f32 %v1983, %v1984
        %v1986 = vadd.f32 %v1985, %v937
        %v1987 = vsel %vm1579, %v939, 0.0
        %v1988 = vadd.f32 %v1986, %v1987
        %v1989 = vadd.f32 %v1988, %v943
        %v1990 = vsel %vm1579, %v945, 0.0
        %v1991 = vadd.f32 %v1989, %v1990
        %v1992 = vadd.f32 %v1991, %v949
        %v1993 = vsel %vm1579, %v951, 0.0
        %v1994 = vadd.f32 %v1992, %v1993
        %v1995 = vadd.f32 %v1994, %v955
        %v1996 = vsel %vm1579, %v957, 0.0
        %v1997 = vadd.f32 %v1995, %v1996
        %v1998 = vadd.f32 %v1997, %v961
        %v1999 = vsel %vm1579, %v963, 0.0
        %v2000 = vadd.f32 %v1998, %v1999
        %v2001 = vadd.f32 %v2000, %v967
        %v2002 = vsel %vm1579, %v969, 0.0
        %v2003 = vadd.f32 %v2001, %v2002
        %v2004 = vadd.f32 %v2003, %v973
        %v2005 = vsel %vm1579, %v975, 0.0
        %v2006 = vadd.f32 %v2004, %v2005
        %v2007 = vadd.f32 %v2006, %v979
        %v2008 = vsel %vm1579, %v981, 0.0
        %v2009 = vadd.f32 %v2007, %v2008
        %v2010 = vadd.f32 %v2009, %v985
        %v2011 = vsel %vm1579, %v987, 0.0
        %v2012 = vadd.f32 %v2010, %v2011
        %v2013 = vadd.f32 %v2012, %v991
        %v2014 = vsel %vm1579, %v993, 0.0
        %v2015 = vadd.f32 %v2013, %v2014
        %v2016 = vadd.f32 %v2015, %v997
        %v2017 = vsel %vm1579, %v999, 0.0
        %v2018 = vadd.f32 %v2016, %v2017
        %v2019 = vadd.f32 %v2018, %v1003
        %v2020 = vsel %vm1579, %v1005, 0.0
        %v2021 = vadd.f32 %v2019, %v2020
        %v2022 = vadd.f32 %v2021, %v1009
        %v2023 = vsel %vm1579, %v1011, 0.0
        %v2024 = vadd.f32 %v2022, %v2023
        %v2025 = vadd.f32 %v2024, %v1015
        %v2026 = vsel %vm1579, %v1017, 0.0
        %v2027 = vadd.f32 %v2025, %v2026
        %2028 = vadd.xlane.f32.xlu0 %v2027
        %v2029 = vpop.xlane.xlu0 %2028
        %v2030 = vrot.slane %v2029, 4
        %v2031 = vadd.f32 %v2029, %v2030
        %v2032 = vrot.slane %v2031, 2
        %v2033 = vadd.f32 %v2031, %v2032
        %v2034 = vrot.slane %v2033, 1
        %v2035 = vadd.f32 %v2033, %v2034
        %s2036 = vtos %v2035
        %v2037 = vsel %vm1579, %v1076, 0.0
        %v2038 = vadd.f32 %v1075, %v2037
        %v2039 = vadd.f32 %v2038, %v1077
        %v2040 = vsel %vm1579, %v1078, 0.0
        %v2041 = vadd.f32 %v2039, %v2040
        %v2042 = vadd.f32 %v2041, %v1079
        %v2043 = vsel %vm1579, %v1080, 0.0
        %v2044 = vadd.f32 %v2042, %v2043
        %v2045 = vadd.f32 %v2044, %v1081
        %v2046 = vsel %vm1579, %v1082, 0.0
        %v2047 = vadd.f32 %v2045, %v2046
        %v2048 = vadd.f32 %v2047, %v1083
        %v2049 = vsel %vm1579, %v1084, 0.0
        %v2050 = vadd.f32 %v2048, %v2049
        %v2051 = vadd.f32 %v2050, %v1085
        %v2052 = vsel %vm1579, %v1086, 0.0
        %v2053 = vadd.f32 %v2051, %v2052
        %v2054 = vadd.f32 %v2053, %v1087
        %v2055 = vsel %vm1579, %v1088, 0.0
        %v2056 = vadd.f32 %v2054, %v2055
        %v2057 = vadd.f32 %v2056, %v1089
        %v2058 = vsel %vm1579, %v1090, 0.0
        %v2059 = vadd.f32 %v2057, %v2058
        %v2060 = vadd.f32 %v2059, %v1091
        %v2061 = vsel %vm1579, %v1092, 0.0
        %v2062 = vadd.f32 %v2060, %v2061
        %v2063 = vadd.f32 %v2062, %v1093
        %v2064 = vsel %vm1579, %v1094, 0.0
        %v2065 = vadd.f32 %v2063, %v2064
        %v2066 = vadd.f32 %v2065, %v1095
        %v2067 = vsel %vm1579, %v1096, 0.0
        %v2068 = vadd.f32 %v2066, %v2067
        %v2069 = vadd.f32 %v2068, %v1097
        %v2070 = vsel %vm1579, %v1098, 0.0
        %v2071 = vadd.f32 %v2069, %v2070
        %v2072 = vadd.f32 %v2071, %v1099
        %v2073 = vsel %vm1579, %v1100, 0.0
        %v2074 = vadd.f32 %v2072, %v2073
        %v2075 = vadd.f32 %v2074, %v1101
        %v2076 = vsel %vm1579, %v1102, 0.0
        %v2077 = vadd.f32 %v2075, %v2076
        %v2078 = vadd.f32 %v2077, %v1103
        %v2079 = vsel %vm1579, %v1104, 0.0
        %v2080 = vadd.f32 %v2078, %v2079
        %v2081 = vadd.f32 %v2080, %v1105
        %v2082 = vsel %vm1579, %v1106, 0.0
        %v2083 = vadd.f32 %v2081, %v2082
        %v2084 = vadd.f32 %v2083, %v1107
        %v2085 = vsel %vm1579, %v1108, 0.0
        %v2086 = vadd.f32 %v2084, %v2085
        %v2087 = vadd.f32 %v2086, %v1109
        %v2088 = vsel %vm1579, %v1110, 0.0
        %v2089 = vadd.f32 %v2087, %v2088
        %v2090 = vadd.f32 %v2089, %v1111
        %v2091 = vsel %vm1579, %v1112, 0.0
        %v2092 = vadd.f32 %v2090, %v2091
        %v2093 = vadd.f32 %v2092, %v1113
        %v2094 = vsel %vm1579, %v1114, 0.0
        %v2095 = vadd.f32 %v2093, %v2094
        %v2096 = vadd.f32 %v2095, %v1115
        %v2097 = vsel %vm1579, %v1116, 0.0
        %v2098 = vadd.f32 %v2096, %v2097
        %v2099 = vadd.f32 %v2098, %v1117
        %v2100 = vsel %vm1579, %v1118, 0.0
        %v2101 = vadd.f32 %v2099, %v2100
        %v2102 = vadd.f32 %v2101, %v1119
        %v2103 = vsel %vm1579, %v1120, 0.0
        %v2104 = vadd.f32 %v2102, %v2103
        %v2105 = vadd.f32 %v2104, %v1121
        %v2106 = vsel %vm1579, %v1122, 0.0
        %v2107 = vadd.f32 %v2105, %v2106
        %v2108 = vadd.f32 %v2107, %v1123
        %v2109 = vsel %vm1579, %v1124, 0.0
        %v2110 = vadd.f32 %v2108, %v2109
        %v2111 = vadd.f32 %v2110, %v1125
        %v2112 = vsel %vm1579, %v1126, 0.0
        %v2113 = vadd.f32 %v2111, %v2112
        %v2114 = vadd.f32 %v2113, %v1127
        %v2115 = vsel %vm1579, %v1128, 0.0
        %v2116 = vadd.f32 %v2114, %v2115
        %v2117 = vadd.f32 %v2116, %v1129
        %v2118 = vsel %vm1579, %v1130, 0.0
        %v2119 = vadd.f32 %v2117, %v2118
        %2120 = vadd.xlane.f32.xlu0 %v2119
        %v2121 = vpop.xlane.xlu0 %2120
        %v2122 = vrot.slane %v2121, 4
        %v2123 = vadd.f32 %v2121, %v2122
        %v2124 = vrot.slane %v2123, 2
        %v2125 = vadd.f32 %v2123, %v2124
        %v2126 = vrot.slane %v2125, 1
        %v2127 = vadd.f32 %v2125, %v2126
        %s2128 = vtos %v2127
        %v2129 = vrcp.pop 50176.0
        %s2130 = vtos %v2129
        %s2131 = smul.f32 %s2036, %s2130
        %s2132 = smul.f32 %s2036, %s2131
        %s2133 = ssub.f32 %s2128, %s2132
        %v2134 = vrcp.pop 50175.0
        %s2135 = vtos %v2134
        %s2136 = smul.f32 %s2133, %s2135
        %v2137 = vstv %s2131
        %v2138 = vsub.f32 %v853, %v2137
        %v2139 = vsub.f32 %v855, %v2137
        %v2140 = vsub.f32 %v859, %v2137
        %v2141 = vsub.f32 %v861, %v2137
        %v2142 = vsub.f32 %v865, %v2137
        %v2143 = vsub.f32 %v867, %v2137
        %v2144 = vsub.f32 %v871, %v2137
        %v2145 = vsub.f32 %v873, %v2137
        %v2146 = vsub.f32 %v877, %v2137
        %v2147 = vsub.f32 %v879, %v2137
        %v2148 = vsub.f32 %v883, %v2137
        %v2149 = vsub.f32 %v885, %v2137
        %v2150 = vsub.f32 %v889, %v2137
        %v2151 = vsub.f32 %v891, %v2137
        %v2152 = vsub.f32 %v895, %v2137
        %v2153 = vsub.f32 %v897, %v2137
        %v2154 = vsub.f32 %v901, %v2137
        %v2155 = vsub.f32 %v903, %v2137
        %v2156 = vsub.f32 %v907, %v2137
        %v2157 = vsub.f32 %v909, %v2137
        %v2158 = vsub.f32 %v913, %v2137
        %v2159 = vsub.f32 %v915, %v2137
        %v2160 = vsub.f32 %v919, %v2137
        %v2161 = vsub.f32 %v921, %v2137
        %v2162 = vsub.f32 %v925, %v2137
        %v2163 = vsub.f32 %v927, %v2137
        %v2164 = vsub.f32 %v931, %v2137
        %v2165 = vsub.f32 %v933, %v2137
        %v2166 = vsub.f32 %v937, %v2137
        %v2167 = vsub.f32 %v939, %v2137
        %v2168 = vsub.f32 %v943, %v2137
        %v2169 = vsub.f32 %v945, %v2137
        %v2170 = vsub.f32 %v949, %v2137
        %v2171 = vsub.f32 %v951, %v2137
        %v2172 = vsub.f32 %v955, %v2137
        %v2173 = vsub.f32 %v957, %v2137
        %v2174 = vsub.f32 %v961, %v2137
        %v2175 = vsub.f32 %v963, %v2137
        %v2176 = vsub.f32 %v967, %v2137
        %v2177 = vsub.f32 %v969, %v2137
        %v2178 = vsub.f32 %v973, %v2137
        %v2179 = vsub.f32 %v975, %v2137
        %v2180 = vsub.f32 %v979, %v2137
        %v2181 = vsub.f32 %v981, %v2137
        %v2182 = vsub.f32 %v985, %v2137
        %v2183 = vsub.f32 %v987, %v2137
        %v2184 = vsub.f32 %v991, %v2137
        %v2185 = vsub.f32 %v993, %v2137
        %v2186 = vsub.f32 %v997, %v2137
        %v2187 = vsub.f32 %v999, %v2137
        %v2188 = vsub.f32 %v1003, %v2137
        %v2189 = vsub.f32 %v1005, %v2137
        %v2190 = vsub.f32 %v1009, %v2137
        %v2191 = vsub.f32 %v1011, %v2137
        %v2192 = vsub.f32 %v1015, %v2137
        %v2193 = vsub.f32 %v1017, %v2137
        %v2194 = vstv %s2136
        %v2195 = vrsqrt.pop %v2194
        %s2196 = vtos %v2195
        %v2197 = vstv %s2196
        %v2198 = vmul.f32 %v2138, %v2197
        %v2199 = vmul.f32 %v2139, %v2197
        %v2200 = vmul.f32 %v2140, %v2197
        %v2201 = vmul.f32 %v2141, %v2197
        %v2202 = vmul.f32 %v2142, %v2197
        %v2203 = vmul.f32 %v2143, %v2197
        %v2204 = vmul.f32 %v2144, %v2197
        %v2205 = vmul.f32 %v2145, %v2197
        %v2206 = vmul.f32 %v2146, %v2197
        %v2207 = vmul.f32 %v2147, %v2197
        %v2208 = vmul.f32 %v2148, %v2197
        %v2209 = vmul.f32 %v2149, %v2197
        %v2210 = vmul.f32 %v2150, %v2197
        %v2211 = vmul.f32 %v2151, %v2197
        %v2212 = vmul.f32 %v2152, %v2197
        %v2213 = vmul.f32 %v2153, %v2197
        %v2214 = vmul.f32 %v2154, %v2197
        %v2215 = vmul.f32 %v2155, %v2197
        %v2216 = vmul.f32 %v2156, %v2197
        %v2217 = vmul.f32 %v2157, %v2197
        %v2218 = vmul.f32 %v2158, %v2197
        %v2219 = vmul.f32 %v2159, %v2197
        %v2220 = vmul.f32 %v2160, %v2197
        %v2221 = vmul.f32 %v2161, %v2197
        %v2222 = vmul.f32 %v2162, %v2197
        %v2223 = vmul.f32 %v2163, %v2197
        %v2224 = vmul.f32 %v2164, %v2197
        %v2225 = vmul.f32 %v2165, %v2197
        %v2226 = vmul.f32 %v2166, %v2197
        %v2227 = vmul.f32 %v2167, %v2197
        %v2228 = vmul.f32 %v2168, %v2197
        %v2229 = vmul.f32 %v2169, %v2197
        %v2230 = vmul.f32 %v2170, %v2197
        %v2231 = vmul.f32 %v2171, %v2197
        %v2232 = vmul.f32 %v2172, %v2197
        %v2233 = vmul.f32 %v2173, %v2197
        %v2234 = vmul.f32 %v2174, %v2197
        %v2235 = vmul.f32 %v2175, %v2197
        %v2236 = vmul.f32 %v2176, %v2197
        %v2237 = vmul.f32 %v2177, %v2197
        %v2238 = vmul.f32 %v2178, %v2197
        %v2239 = vmul.f32 %v2179, %v2197
        %v2240 = vmul.f32 %v2180, %v2197
        %v2241 = vmul.f32 %v2181, %v2197
        %v2242 = vmul.f32 %v2182, %v2197
        %v2243 = vmul.f32 %v2183, %v2197
        %v2244 = vmul.f32 %v2184, %v2197
        %v2245 = vmul.f32 %v2185, %v2197
        %v2246 = vmul.f32 %v2186, %v2197
        %v2247 = vmul.f32 %v2187, %v2197
        %v2248 = vmul.f32 %v2188, %v2197
        %v2249 = vmul.f32 %v2189, %v2197
        %v2250 = vmul.f32 %v2190, %v2197
        %v2251 = vmul.f32 %v2191, %v2197
        %v2252 = vmul.f32 %v2192, %v2197
        %v2253 = vmul.f32 %v2193, %v2197
        %s2254 = scalar_lea.vmem %s205, 448 [#allocation5]
        %2255 = vst [vmem:[%s2254] sm:$0xff] %v2198
        %2256 = vst.msk [vmem:[%s2254 + $0x8] sm:$0xff] %vm1579, %v2199
        %2257 = vst [vmem:[%s2254 + $0x10] sm:$0xff] %v2200
        %2258 = vst.msk [vmem:[%s2254 + $0x18] sm:$0xff] %vm1579, %v2201
        %2259 = vst [vmem:[%s2254 + $0x20] sm:$0xff] %v2202
        %2260 = vst.msk [vmem:[%s2254 + $0x28] sm:$0xff] %vm1579, %v2203
        %2261 = vst [vmem:[%s2254 + $0x30] sm:$0xff] %v2204
        %2262 = vst.msk [vmem:[%s2254 + $0x38] sm:$0xff] %vm1579, %v2205
        %2263 = vst [vmem:[%s2254 + $0x40] sm:$0xff] %v2206
        %2264 = vst.msk [vmem:[%s2254 + $0x48] sm:$0xff] %vm1579, %v2207
        %2265 = vst [vmem:[%s2254 + $0x50] sm:$0xff] %v2208
        %2266 = vst.msk [vmem:[%s2254 + $0x58] sm:$0xff] %vm1579, %v2209
        %2267 = vst [vmem:[%s2254 + $0x60] sm:$0xff] %v2210
        %2268 = vst.msk [vmem:[%s2254 + $0x68] sm:$0xff] %vm1579, %v2211
        %2269 = vst [vmem:[%s2254 + $0x70] sm:$0xff] %v2212
        %2270 = vst.msk [vmem:[%s2254 + $0x78] sm:$0xff] %vm1579, %v2213
        %2271 = vst [vmem:[%s2254 + $0x80] sm:$0xff] %v2214
        %2272 = vst.msk [vmem:[%s2254 + $0x88] sm:$0xff] %vm1579, %v2215
        %2273 = vst [vmem:[%s2254 + $0x90] sm:$0xff] %v2216
        %2274 = vst.msk [vmem:[%s2254 + $0x98] sm:$0xff] %vm1579, %v2217
        %2275 = vst [vmem:[%s2254 + $0xa0] sm:$0xff] %v2218
        %2276 = vst.msk [vmem:[%s2254 + $0xa8] sm:$0xff] %vm1579, %v2219
        %2277 = vst [vmem:[%s2254 + $0xb0] sm:$0xff] %v2220
        %2278 = vst.msk [vmem:[%s2254 + $0xb8] sm:$0xff] %vm1579, %v2221
        %2279 = vst [vmem:[%s2254 + $0xc0] sm:$0xff] %v2222
        %2280 = vst.msk [vmem:[%s2254 + $0xc8] sm:$0xff] %vm1579, %v2223
        %2281 = vst [vmem:[%s2254 + $0xd0] sm:$0xff] %v2224
        %2282 = vst.msk [vmem:[%s2254 + $0xd8] sm:$0xff] %vm1579, %v2225
        %2283 = vst [vmem:[%s2254 + $0xe0] sm:$0xff] %v2226
        %2284 = vst.msk [vmem:[%s2254 + $0xe8] sm:$0xff] %vm1579, %v2227
        %2285 = vst [vmem:[%s2254 + $0xf0] sm:$0xff] %v2228
        %2286 = vst.msk [vmem:[%s2254 + $0xf8] sm:$0xff] %vm1579, %v2229
        %2287 = vst [vmem:[%s2254 + $0x100] sm:$0xff] %v2230
        %2288 = vst.msk [vmem:[%s2254 + $0x108] sm:$0xff] %vm1579, %v2231
        %2289 = vst [vmem:[%s2254 + $0x110] sm:$0xff] %v2232
        %2290 = vst.msk [vmem:[%s2254 + $0x118] sm:$0xff] %vm1579, %v2233
        %2291 = vst [vmem:[%s2254 + $0x120] sm:$0xff] %v2234
        %2292 = vst.msk [vmem:[%s2254 + $0x128] sm:$0xff] %vm1579, %v2235
        %2293 = vst [vmem:[%s2254 + $0x130] sm:$0xff] %v2236
        %2294 = vst.msk [vmem:[%s2254 + $0x138] sm:$0xff] %vm1579, %v2237
        %2295 = vst [vmem:[%s2254 + $0x140] sm:$0xff] %v2238
        %2296 = vst.msk [vmem:[%s2254 + $0x148] sm:$0xff] %vm1579, %v2239
        %2297 = vst [vmem:[%s2254 + $0x150] sm:$0xff] %v2240
        %2298 = vst.msk [vmem:[%s2254 + $0x158] sm:$0xff] %vm1579, %v2241
        %2299 = vst [vmem:[%s2254 + $0x160] sm:$0xff] %v2242
        %2300 = vst.msk [vmem:[%s2254 + $0x168] sm:$0xff] %vm1579, %v2243
        %2301 = vst [vmem:[%s2254 + $0x170] sm:$0xff] %v2244
        %2302 = vst.msk [vmem:[%s2254 + $0x178] sm:$0xff] %vm1579, %v2245
        %2303 = vst [vmem:[%s2254 + $0x180] sm:$0xff] %v2246
        %2304 = vst.msk [vmem:[%s2254 + $0x188] sm:$0xff] %vm1579, %v2247
        %2305 = vst [vmem:[%s2254 + $0x190] sm:$0xff] %v2248
        %2306 = vst.msk [vmem:[%s2254 + $0x198] sm:$0xff] %vm1579, %v2249
        %2307 = vst [vmem:[%s2254 + $0x1a0] sm:$0xff] %v2250
        %2308 = vst.msk [vmem:[%s2254 + $0x1a8] sm:$0xff] %vm1579, %v2251
        %2309 = vst [vmem:[%s2254 + $0x1b0] sm:$0xff] %v2252
        %2310 = vst.msk [vmem:[%s2254 + $0x1b8] sm:$0xff] %vm1579, %v2253
        %v2311 = vsel %vm1579, %v1200, 0.0
        %v2312 = vadd.f32 %v1193, %v2311
        %v2313 = vadd.f32 %v2312, %v1207
        %v2314 = vsel %vm1579, %v1214, 0.0
        %v2315 = vadd.f32 %v2313, %v2314
        %v2316 = vadd.f32 %v2315, %v1221
        %v2317 = vsel %vm1579, %v1228, 0.0
        %v2318 = vadd.f32 %v2316, %v2317
        %v2319 = vadd.f32 %v2318, %v1235
        %v2320 = vsel %vm1579, %v1242, 0.0
        %v2321 = vadd.f32 %v2319, %v2320
        %v2322 = vadd.f32 %v2321, %v1249
        %v2323 = vsel %vm1579, %v1256, 0.0
        %v2324 = vadd.f32 %v2322, %v2323
        %v2325 = vadd.f32 %v2324, %v1263
        %v2326 = vsel %vm1579, %v1270, 0.0
        %v2327 = vadd.f32 %v2325, %v2326
        %v2328 = vadd.f32 %v2327, %v1277
        %v2329 = vsel %vm1579, %v1284, 0.0
        %v2330 = vadd.f32 %v2328, %v2329
        %v2331 = vadd.f32 %v2330, %v1291
        %v2332 = vsel %vm1579, %v1298, 0.0
        %v2333 = vadd.f32 %v2331, %v2332
        %v2334 = vadd.f32 %v2333, %v1305
        %v2335 = vsel %vm1579, %v1312, 0.0
        %v2336 = vadd.f32 %v2334, %v2335
        %v2337 = vadd.f32 %v2336, %v1319
        %v2338 = vsel %vm1579, %v1326, 0.0
        %v2339 = vadd.f32 %v2337, %v2338
        %v2340 = vadd.f32 %v2339, %v1333
        %v2341 = vsel %vm1579, %v1340, 0.0
        %v2342 = vadd.f32 %v2340, %v2341
        %v2343 = vadd.f32 %v2342, %v1347
        %v2344 = vsel %vm1579, %v1354, 0.0
        %v2345 = vadd.f32 %v2343, %v2344
        %v2346 = vadd.f32 %v2345, %v1361
        %v2347 = vsel %vm1579, %v1368, 0.0
        %v2348 = vadd.f32 %v2346, %v2347
        %v2349 = vadd.f32 %v2348, %v1375
        %v2350 = vsel %vm1579, %v1382, 0.0
        %v2351 = vadd.f32 %v2349, %v2350
        %v2352 = vadd.f32 %v2351, %v1389
        %v2353 = vsel %vm1579, %v1396, 0.0
        %v2354 = vadd.f32 %v2352, %v2353
        %v2355 = vadd.f32 %v2354, %v1403
        %v2356 = vsel %vm1579, %v1410, 0.0
        %v2357 = vadd.f32 %v2355, %v2356
        %v2358 = vadd.f32 %v2357, %v1417
        %v2359 = vsel %vm1579, %v1424, 0.0
        %v2360 = vadd.f32 %v2358, %v2359
        %v2361 = vadd.f32 %v2360, %v1431
        %v2362 = vsel %vm1579, %v1438, 0.0
        %v2363 = vadd.f32 %v2361, %v2362
        %v2364 = vadd.f32 %v2363, %v1445
        %v2365 = vsel %vm1579, %v1452, 0.0
        %v2366 = vadd.f32 %v2364, %v2365
        %v2367 = vadd.f32 %v2366, %v1459
        %v2368 = vsel %vm1579, %v1466, 0.0
        %v2369 = vadd.f32 %v2367, %v2368
        %v2370 = vadd.f32 %v2369, %v1473
        %v2371 = vsel %vm1579, %v1480, 0.0
        %v2372 = vadd.f32 %v2370, %v2371
        %v2373 = vadd.f32 %v2372, %v1487
        %v2374 = vsel %vm1579, %v1494, 0.0
        %v2375 = vadd.f32 %v2373, %v2374
        %v2376 = vadd.f32 %v2375, %v1501
        %v2377 = vsel %vm1579, %v1508, 0.0
        %v2378 = vadd.f32 %v2376, %v2377
        %v2379 = vadd.f32 %v2378, %v1515
        %v2380 = vsel %vm1579, %v1522, 0.0
        %v2381 = vadd.f32 %v2379, %v2380
        %v2382 = vadd.f32 %v2381, %v1529
        %v2383 = vsel %vm1579, %v1536, 0.0
        %v2384 = vadd.f32 %v2382, %v2383
        %v2385 = vadd.f32 %v2384, %v1543
        %v2386 = vsel %vm1579, %v1550, 0.0
        %v2387 = vadd.f32 %v2385, %v2386
        %v2388 = vadd.f32 %v2387, %v1557
        %v2389 = vsel %vm1579, %v1564, 0.0
        %v2390 = vadd.f32 %v2388, %v2389
        %v2391 = vadd.f32 %v2390, %v1571
        %v2392 = vsel %vm1579, %v1578, 0.0
        %v2393 = vadd.f32 %v2391, %v2392
        %2394 = vadd.xlane.f32.xlu0 %v2393
        %v2395 = vpop.xlane.xlu0 %2394
        %v2396 = vrot.slane %v2395, 4
        %v2397 = vadd.f32 %v2395, %v2396
        %v2398 = vrot.slane %v2397, 2
        %v2399 = vadd.f32 %v2397, %v2398
        %v2400 = vrot.slane %v2399, 1
        %v2401 = vadd.f32 %v2399, %v2400
        %s2402 = vtos %v2401
        %v2403 = vmul.f32 %v1193, %v1193
        %v2404 = vmul.f32 %v1200, %v1200
        %v2405 = vmul.f32 %v1207, %v1207
        %v2406 = vmul.f32 %v1214, %v1214
        %v2407 = vmul.f32 %v1221, %v1221
        %v2408 = vmul.f32 %v1228, %v1228
        %v2409 = vmul.f32 %v1235, %v1235
        %v2410 = vmul.f32 %v1242, %v1242
        %v2411 = vmul.f32 %v1249, %v1249
        %v2412 = vmul.f32 %v1256, %v1256
        %v2413 = vmul.f32 %v1263, %v1263
        %v2414 = vmul.f32 %v1270, %v1270
        %v2415 = vmul.f32 %v1277, %v1277
        %v2416 = vmul.f32 %v1284, %v1284
        %v2417 = vmul.f32 %v1291, %v1291
        %v2418 = vmul.f32 %v1298, %v1298
        %v2419 = vmul.f32 %v1305, %v1305
        %v2420 = vmul.f32 %v1312, %v1312
        %v2421 = vmul.f32 %v1319, %v1319
        %v2422 = vmul.f32 %v1326, %v1326
        %v2423 = vmul.f32 %v1333, %v1333
        %v2424 = vmul.f32 %v1340, %v1340
        %v2425 = vmul.f32 %v1347, %v1347
        %v2426 = vmul.f32 %v1354, %v1354
        %v2427 = vmul.f32 %v1361, %v1361
        %v2428 = vmul.f32 %v1368, %v1368
        %v2429 = vmul.f32 %v1375, %v1375
        %v2430 = vmul.f32 %v1382, %v1382
        %v2431 = vmul.f32 %v1389, %v1389
        %v2432 = vmul.f32 %v1396, %v1396
        %v2433 = vmul.f32 %v1403, %v1403
        %v2434 = vmul.f32 %v1410, %v1410
        %v2435 = vmul.f32 %v1417, %v1417
        %v2436 = vmul.f32 %v1424, %v1424
        %v2437 = vmul.f32 %v1431, %v1431
        %v2438 = vmul.f32 %v1438, %v1438
        %v2439 = vmul.f32 %v1445, %v1445
        %v2440 = vmul.f32 %v1452, %v1452
        %v2441 = vmul.f32 %v1459, %v1459
        %v2442 = vmul.f32 %v1466, %v1466
        %v2443 = vmul.f32 %v1473, %v1473
        %v2444 = vmul.f32 %v1480, %v1480
        %v2445 = vmul.f32 %v1487, %v1487
        %v2446 = vmul.f32 %v1494, %v1494
        %v2447 = vmul.f32 %v1501, %v1501
        %v2448 = vmul.f32 %v1508, %v1508
        %v2449 = vmul.f32 %v1515, %v1515
        %v2450 = vmul.f32 %v1522, %v1522
        %v2451 = vmul.f32 %v1529, %v1529
        %v2452 = vmul.f32 %v1536, %v1536
        %v2453 = vmul.f32 %v1543, %v1543
        %v2454 = vmul.f32 %v1550, %v1550
        %v2455 = vmul.f32 %v1557, %v1557
        %v2456 = vmul.f32 %v1564, %v1564
        %v2457 = vmul.f32 %v1571, %v1571
        %v2458 = vmul.f32 %v1578, %v1578
        %v2459 = vsel %vm1579, %v2404, 0.0
        %v2460 = vadd.f32 %v2403, %v2459
        %v2461 = vadd.f32 %v2460, %v2405
        %v2462 = vsel %vm1579, %v2406, 0.0
        %v2463 = vadd.f32 %v2461, %v2462
        %v2464 = vadd.f32 %v2463, %v2407
        %v2465 = vsel %vm1579, %v2408, 0.0
        %v2466 = vadd.f32 %v2464, %v2465
        %v2467 = vadd.f32 %v2466, %v2409
        %v2468 = vsel %vm1579, %v2410, 0.0
        %v2469 = vadd.f32 %v2467, %v2468
        %v2470 = vadd.f32 %v2469, %v2411
        %v2471 = vsel %vm1579, %v2412, 0.0
        %v2472 = vadd.f32 %v2470, %v2471
        %v2473 = vadd.f32 %v2472, %v2413
        %v2474 = vsel %vm1579, %v2414, 0.0
        %v2475 = vadd.f32 %v2473, %v2474
        %v2476 = vadd.f32 %v2475, %v2415
        %v2477 = vsel %vm1579, %v2416, 0.0
        %v2478 = vadd.f32 %v2476, %v2477
        %v2479 = vadd.f32 %v2478, %v2417
        %v2480 = vsel %vm1579, %v2418, 0.0
        %v2481 = vadd.f32 %v2479, %v2480
        %v2482 = vadd.f32 %v2481, %v2419
        %v2483 = vsel %vm1579, %v2420, 0.0
        %v2484 = vadd.f32 %v2482, %v2483
        %v2485 = vadd.f32 %v2484, %v2421
        %v2486 = vsel %vm1579, %v2422, 0.0
        %v2487 = vadd.f32 %v2485, %v2486
        %v2488 = vadd.f32 %v2487, %v2423
        %v2489 = vsel %vm1579, %v2424, 0.0
        %v2490 = vadd.f32 %v2488, %v2489
        %v2491 = vadd.f32 %v2490, %v2425
        %v2492 = vsel %vm1579, %v2426, 0.0
        %v2493 = vadd.f32 %v2491, %v2492
        %v2494 = vadd.f32 %v2493, %v2427
        %v2495 = vsel %vm1579, %v2428, 0.0
        %v2496 = vadd.f32 %v2494, %v2495
        %v2497 = vadd.f32 %v2496, %v2429
        %v2498 = vsel %vm1579, %v2430, 0.0
        %v2499 = vadd.f32 %v2497, %v2498
        %v2500 = vadd.f32 %v2499, %v2431
        %v2501 = vsel %vm1579, %v2432, 0.0
        %v2502 = vadd.f32 %v2500, %v2501
        %v2503 = vadd.f32 %v2502, %v2433
        %v2504 = vsel %vm1579, %v2434, 0.0
        %v2505 = vadd.f32 %v2503, %v2504
        %v2506 = vadd.f32 %v2505, %v2435
        %v2507 = vsel %vm1579, %v2436, 0.0
        %v2508 = vadd.f32 %v2506, %v2507
        %v2509 = vadd.f32 %v2508, %v2437
        %v2510 = vsel %vm1579, %v2438, 0.0
        %v2511 = vadd.f32 %v2509, %v2510
        %v2512 = vadd.f32 %v2511, %v2439
        %v2513 = vsel %vm1579, %v2440, 0.0
        %v2514 = vadd.f32 %v2512, %v2513
        %v2515 = vadd.f32 %v2514, %v2441
        %v2516 = vsel %vm1579, %v2442, 0.0
        %v2517 = vadd.f32 %v2515, %v2516
        %v2518 = vadd.f32 %v2517, %v2443
        %v2519 = vsel %vm1579, %v2444, 0.0
        %v2520 = vadd.f32 %v2518, %v2519
        %v2521 = vadd.f32 %v2520, %v2445
        %v2522 = vsel %vm1579, %v2446, 0.0
        %v2523 = vadd.f32 %v2521, %v2522
        %v2524 = vadd.f32 %v2523, %v2447
        %v2525 = vsel %vm1579, %v2448, 0.0
        %v2526 = vadd.f32 %v2524, %v2525
        %v2527 = vadd.f32 %v2526, %v2449
        %v2528 = vsel %vm1579, %v2450, 0.0
        %v2529 = vadd.f32 %v2527, %v2528
        %v2530 = vadd.f32 %v2529, %v2451
        %v2531 = vsel %vm1579, %v2452, 0.0
        %v2532 = vadd.f32 %v2530, %v2531
        %v2533 = vadd.f32 %v2532, %v2453
        %v2534 = vsel %vm1579, %v2454, 0.0
        %v2535 = vadd.f32 %v2533, %v2534
        %v2536 = vadd.f32 %v2535, %v2455
        %v2537 = vsel %vm1579, %v2456, 0.0
        %v2538 = vadd.f32 %v2536, %v2537
        %v2539 = vadd.f32 %v2538, %v2457
        %v2540 = vsel %vm1579, %v2458, 0.0
        %v2541 = vadd.f32 %v2539, %v2540
        %2542 = vadd.xlane.f32.xlu0 %v2541
        %v2543 = vpop.xlane.xlu0 %2542
        %v2544 = vrot.slane %v2543, 4
        %v2545 = vadd.f32 %v2543, %v2544
        %v2546 = vrot.slane %v2545, 2
        %v2547 = vadd.f32 %v2545, %v2546
        %v2548 = vrot.slane %v2547, 1
        %v2549 = vadd.f32 %v2547, %v2548
        %s2550 = vtos %v2549
        %v2551 = vrcp.pop 50176.0
        %s2552 = vtos %v2551
        %s2553 = smul.f32 %s2402, %s2552
        %s2554 = smul.f32 %s2402, %s2553
        %s2555 = ssub.f32 %s2550, %s2554
        %v2556 = vrcp.pop 50175.0
        %s2557 = vtos %v2556
        %s2558 = smul.f32 %s2555, %s2557
        %v2559 = vstv %s2553
        %v2560 = vsub.f32 %v1193, %v2559
        %v2561 = vsub.f32 %v1200, %v2559
        %v2562 = vsub.f32 %v1207, %v2559
        %v2563 = vsub.f32 %v1214, %v2559
        %v2564 = vsub.f32 %v1221, %v2559
        %v2565 = vsub.f32 %v1228, %v2559
        %v2566 = vsub.f32 %v1235, %v2559
        %v2567 = vsub.f32 %v1242, %v2559
        %v2568 = vsub.f32 %v1249, %v2559
        %v2569 = vsub.f32 %v1256, %v2559
        %v2570 = vsub.f32 %v1263, %v2559
        %v2571 = vsub.f32 %v1270, %v2559
        %v2572 = vsub.f32 %v1277, %v2559
        %v2573 = vsub.f32 %v1284, %v2559
        %v2574 = vsub.f32 %v1291, %v2559
        %v2575 = vsub.f32 %v1298, %v2559
        %v2576 = vsub.f32 %v1305, %v2559
        %v2577 = vsub.f32 %v1312, %v2559
        %v2578 = vsub.f32 %v1319, %v2559
        %v2579 = vsub.f32 %v1326, %v2559
        %v2580 = vsub.f32 %v1333, %v2559
        %v2581 = vsub.f32 %v1340, %v2559
        %v2582 = vsub.f32 %v1347, %v2559
        %v2583 = vsub.f32 %v1354, %v2559
        %v2584 = vsub.f32 %v1361, %v2559
        %v2585 = vsub.f32 %v1368, %v2559
        %v2586 = vsub.f32 %v1375, %v2559
        %v2587 = vsub.f32 %v1382, %v2559
        %v2588 = vsub.f32 %v1389, %v2559
        %v2589 = vsub.f32 %v1396, %v2559
        %v2590 = vsub.f32 %v1403, %v2559
        %v2591 = vsub.f32 %v1410, %v2559
        %v2592 = vsub.f32 %v1417, %v2559
        %v2593 = vsub.f32 %v1424, %v2559
        %v2594 = vsub.f32 %v1431, %v2559
        %v2595 = vsub.f32 %v1438, %v2559
        %v2596 = vsub.f32 %v1445, %v2559
        %v2597 = vsub.f32 %v1452, %v2559
        %v2598 = vsub.f32 %v1459, %v2559
        %v2599 = vsub.f32 %v1466, %v2559
        %v2600 = vsub.f32 %v1473, %v2559
        %v2601 = vsub.f32 %v1480, %v2559
        %v2602 = vsub.f32 %v1487, %v2559
        %v2603 = vsub.f32 %v1494, %v2559
        %v2604 = vsub.f32 %v1501, %v2559
        %v2605 = vsub.f32 %v1508, %v2559
        %v2606 = vsub.f32 %v1515, %v2559
        %v2607 = vsub.f32 %v1522, %v2559
        %v2608 = vsub.f32 %v1529, %v2559
        %v2609 = vsub.f32 %v1536, %v2559
        %v2610 = vsub.f32 %v1543, %v2559
        %v2611 = vsub.f32 %v1550, %v2559
        %v2612 = vsub.f32 %v1557, %v2559
        %v2613 = vsub.f32 %v1564, %v2559
        %v2614 = vsub.f32 %v1571, %v2559
        %v2615 = vsub.f32 %v1578, %v2559
        %v2616 = vstv %s2558
        %v2617 = vrsqrt.pop %v2616
        %s2618 = vtos %v2617
        %v2619 = vstv %s2618
        %v2620 = vmul.f32 %v2560, %v2619
        %v2621 = vmul.f32 %v2561, %v2619
        %v2622 = vmul.f32 %v2562, %v2619
        %v2623 = vmul.f32 %v2563, %v2619
        %v2624 = vmul.f32 %v2564, %v2619
        %v2625 = vmul.f32 %v2565, %v2619
        %v2626 = vmul.f32 %v2566, %v2619
        %v2627 = vmul.f32 %v2567, %v2619
        %v2628 = vmul.f32 %v2568, %v2619
        %v2629 = vmul.f32 %v2569, %v2619
        %v2630 = vmul.f32 %v2570, %v2619
        %v2631 = vmul.f32 %v2571, %v2619
        %v2632 = vmul.f32 %v2572, %v2619
        %v2633 = vmul.f32 %v2573, %v2619
        %v2634 = vmul.f32 %v2574, %v2619
        %v2635 = vmul.f32 %v2575, %v2619
        %v2636 = vmul.f32 %v2576, %v2619
        %v2637 = vmul.f32 %v2577, %v2619
        %v2638 = vmul.f32 %v2578, %v2619
        %v2639 = vmul.f32 %v2579, %v2619
        %v2640 = vmul.f32 %v2580, %v2619
        %v2641 = vmul.f32 %v2581, %v2619
        %v2642 = vmul.f32 %v2582, %v2619
        %v2643 = vmul.f32 %v2583, %v2619
        %v2644 = vmul.f32 %v2584, %v2619
        %v2645 = vmul.f32 %v2585, %v2619
        %v2646 = vmul.f32 %v2586, %v2619
        %v2647 = vmul.f32 %v2587, %v2619
        %v2648 = vmul.f32 %v2588, %v2619
        %v2649 = vmul.f32 %v2589, %v2619
        %v2650 = vmul.f32 %v2590, %v2619
        %v2651 = vmul.f32 %v2591, %v2619
        %v2652 = vmul.f32 %v2592, %v2619
        %v2653 = vmul.f32 %v2593, %v2619
        %v2654 = vmul.f32 %v2594, %v2619
        %v2655 = vmul.f32 %v2595, %v2619
        %v2656 = vmul.f32 %v2596, %v2619
        %v2657 = vmul.f32 %v2597, %v2619
        %v2658 = vmul.f32 %v2598, %v2619
        %v2659 = vmul.f32 %v2599, %v2619
        %v2660 = vmul.f32 %v2600, %v2619
        %v2661 = vmul.f32 %v2601, %v2619
        %v2662 = vmul.f32 %v2602, %v2619
        %v2663 = vmul.f32 %v2603, %v2619
        %v2664 = vmul.f32 %v2604, %v2619
        %v2665 = vmul.f32 %v2605, %v2619
        %v2666 = vmul.f32 %v2606, %v2619
        %v2667 = vmul.f32 %v2607, %v2619
        %v2668 = vmul.f32 %v2608, %v2619
        %v2669 = vmul.f32 %v2609, %v2619
        %v2670 = vmul.f32 %v2610, %v2619
        %v2671 = vmul.f32 %v2611, %v2619
        %v2672 = vmul.f32 %v2612, %v2619
        %v2673 = vmul.f32 %v2613, %v2619
        %v2674 = vmul.f32 %v2614, %v2619
        %v2675 = vmul.f32 %v2615, %v2619
        %s2676 = scalar_lea.vmem %s205, 896 [#allocation5]
        %2677 = vst [vmem:[%s2676] sm:$0xff] %v2620
        %2678 = vst.msk [vmem:[%s2676 + $0x8] sm:$0xff] %vm1579, %v2621
        %2679 = vst [vmem:[%s2676 + $0x10] sm:$0xff] %v2622
        %2680 = vst.msk [vmem:[%s2676 + $0x18] sm:$0xff] %vm1579, %v2623
        %2681 = vst [vmem:[%s2676 + $0x20] sm:$0xff] %v2624
        %2682 = vst.msk [vmem:[%s2676 + $0x28] sm:$0xff] %vm1579, %v2625
        %2683 = vst [vmem:[%s2676 + $0x30] sm:$0xff] %v2626
        %2684 = vst.msk [vmem:[%s2676 + $0x38] sm:$0xff] %vm1579, %v2627
        %2685 = vst [vmem:[%s2676 + $0x40] sm:$0xff] %v2628
        %2686 = vst.msk [vmem:[%s2676 + $0x48] sm:$0xff] %vm1579, %v2629
        %2687 = vst [vmem:[%s2676 + $0x50] sm:$0xff] %v2630
        %2688 = vst.msk [vmem:[%s2676 + $0x58] sm:$0xff] %vm1579, %v2631
        %2689 = vst [vmem:[%s2676 + $0x60] sm:$0xff] %v2632
        %2690 = vst.msk [vmem:[%s2676 + $0x68] sm:$0xff] %vm1579, %v2633
        %2691 = vst [vmem:[%s2676 + $0x70] sm:$0xff] %v2634
        %2692 = vst.msk [vmem:[%s2676 + $0x78] sm:$0xff] %vm1579, %v2635
        %2693 = vst [vmem:[%s2676 + $0x80] sm:$0xff] %v2636
        %2694 = vst.msk [vmem:[%s2676 + $0x88] sm:$0xff] %vm1579, %v2637
        %2695 = vst [vmem:[%s2676 + $0x90] sm:$0xff] %v2638
        %2696 = vst.msk [vmem:[%s2676 + $0x98] sm:$0xff] %vm1579, %v2639
        %2697 = vst [vmem:[%s2676 + $0xa0] sm:$0xff] %v2640
        %2698 = vst.msk [vmem:[%s2676 + $0xa8] sm:$0xff] %vm1579, %v2641
        %2699 = vst [vmem:[%s2676 + $0xb0] sm:$0xff] %v2642
        %2700 = vst.msk [vmem:[%s2676 + $0xb8] sm:$0xff] %vm1579, %v2643
        %2701 = vst [vmem:[%s2676 + $0xc0] sm:$0xff] %v2644
        %2702 = vst.msk [vmem:[%s2676 + $0xc8] sm:$0xff] %vm1579, %v2645
        %2703 = vst [vmem:[%s2676 + $0xd0] sm:$0xff] %v2646
        %2704 = vst.msk [vmem:[%s2676 + $0xd8] sm:$0xff] %vm1579, %v2647
        %2705 = vst [vmem:[%s2676 + $0xe0] sm:$0xff] %v2648
        %2706 = vst.msk [vmem:[%s2676 + $0xe8] sm:$0xff] %vm1579, %v2649
        %2707 = vst [vmem:[%s2676 + $0xf0] sm:$0xff] %v2650
        %2708 = vst.msk [vmem:[%s2676 + $0xf8] sm:$0xff] %vm1579, %v2651
        %2709 = vst [vmem:[%s2676 + $0x100] sm:$0xff] %v2652
        %2710 = vst.msk [vmem:[%s2676 + $0x108] sm:$0xff] %vm1579, %v2653
        %2711 = vst [vmem:[%s2676 + $0x110] sm:$0xff] %v2654
        %2712 = vst.msk [vmem:[%s2676 + $0x118] sm:$0xff] %vm1579, %v2655
        %2713 = vst [vmem:[%s2676 + $0x120] sm:$0xff] %v2656
        %2714 = vst.msk [vmem:[%s2676 + $0x128] sm:$0xff] %vm1579, %v2657
        %2715 = vst [vmem:[%s2676 + $0x130] sm:$0xff] %v2658
        %2716 = vst.msk [vmem:[%s2676 + $0x138] sm:$0xff] %vm1579, %v2659
        %2717 = vst [vmem:[%s2676 + $0x140] sm:$0xff] %v2660
        %2718 = vst.msk [vmem:[%s2676 + $0x148] sm:$0xff] %vm1579, %v2661
        %2719 = vst [vmem:[%s2676 + $0x150] sm:$0xff] %v2662
        %2720 = vst.msk [vmem:[%s2676 + $0x158] sm:$0xff] %vm1579, %v2663
        %2721 = vst [vmem:[%s2676 + $0x160] sm:$0xff] %v2664
        %2722 = vst.msk [vmem:[%s2676 + $0x168] sm:$0xff] %vm1579, %v2665
        %2723 = vst [vmem:[%s2676 + $0x170] sm:$0xff] %v2666
        %2724 = vst.msk [vmem:[%s2676 + $0x178] sm:$0xff] %vm1579, %v2667
        %2725 = vst [vmem:[%s2676 + $0x180] sm:$0xff] %v2668
        %2726 = vst.msk [vmem:[%s2676 + $0x188] sm:$0xff] %vm1579, %v2669
        %2727 = vst [vmem:[%s2676 + $0x190] sm:$0xff] %v2670
        %2728 = vst.msk [vmem:[%s2676 + $0x198] sm:$0xff] %vm1579, %v2671
        %2729 = vst [vmem:[%s2676 + $0x1a0] sm:$0xff] %v2672
        %2730 = vst.msk [vmem:[%s2676 + $0x1a8] sm:$0xff] %vm1579, %v2673
        %2731 = vst [vmem:[%s2676 + $0x1b0] sm:$0xff] %v2674
        %2732 = vst.msk [vmem:[%s2676 + $0x1b8] sm:$0xff] %vm1579, %v2675
        %s2733 = sand.u32 %s116, 1
        %s2734 = scalar_lea.sflag [#allocation4], %s2733
        %s2735 = sand.u32 %s116, 1
        %s2736 = smul.addr %s2735, 1344
        %s2737 = scalar_lea.vmem [#allocation5], %s2736
        // Predicated region
        $region41: #{tpu_custom_call.1} parent=35 // pred_check
          %p2738 = pneg %p126
        $region42: #{tpu_custom_call.1} parent=35 // pred_check_branch
          %2740 = sbr.rel (%p2738) target = $region44
        $region43: #{tpu_custom_call.1} parent=35 // pred_region
          %s2742 = ssub.s32 21504, 21504
          %2743 = vsyncadd %s2734, %s2742
          %s2744 = smul.addr %s19, 168
          %s2745 = smul.addr %s2744, 128
          %s2746 = scalar_lea.hbm %s4, %s2745
          %s2747 = sshll.u32 %s2737, 4
          %s2748 = int_to_ptr.vmem [resolvable:$true] %s2747
          %2753 = dma.vmem_to_hbm [thread:$0]  %s2748, 21504, %s2746, %s2734, 256, 256, 16
        $region44: #{tpu_custom_call.1} parent=35 // pred_fallthru
          _
      $region36: #{tpu_custom_call.1} parent=5 // pred_fallthru
        _
      %p2754 = scmp.le.s32.totalorder 2, %s14
      // Predicated region
      $region45: #{tpu_custom_call.1} parent=5 // pred_check
        %p2755 = pneg %p2754
      $region46: #{tpu_custom_call.1} parent=5 // pred_check_branch
        %2757 = sbr.rel (%p2755) target = $region48
      $region47: #{tpu_custom_call.1} parent=5 // pred_region
        %s2758 = ssub.s32 %s14, 2
        // Predicated region
        $region49: #{tpu_custom_call.1} parent=47 // pred_check
          %p2759 = pneg %p132
        $region50: #{tpu_custom_call.1} parent=47 // pred_check_branch
          %2761 = sbr.rel (%p2759) target = $region52
        $region51: #{tpu_custom_call.1} parent=47 // pred_region
          %s2762 = sand.u32 %s117, 1
          %s2763 = scalar_lea.sflag [#allocation4], %s2762
          %s2764 = sand.u32 %s117, 1
          %s2765 = smul.addr %s2764, 1344
          %s2766 = scalar_lea.vmem [#allocation5], %s2765
          %2767 = dma.done %s2763, 21504
        $region52: #{tpu_custom_call.1} parent=47 // pred_fallthru
          _
      $region48: #{tpu_custom_call.1} parent=5 // pred_fallthru
        _
    $region6: #{tpu_custom_call.1} parent=1 // loop_footer
      %s18 = sadd.s32 1, %s14
    $region7: #{tpu_custom_call.1} parent=1 // loop_footer_branch
      %13 = sbr.rel target = $region3
    $region8: #{tpu_custom_call.1} parent=1 // loop_exit
      _
    %2768 = vsyncpa [#allocation3], 1
    %s2769 = scalar_lea.sflag [#allocation3], 1
    %2770 = vsyncpa %s2769, 1
    %2771 = vsyncpa [#allocation4], 1
    %s2772 = scalar_lea.sflag [#allocation4], 1
    %2773 = vsyncpa %s2772, 1

</llo_original>
